<compile_context>
chip_gen: v5e
topology: v5e:2x2
jax: 0.10.0
libtpu: 0.0.40
codegen_flags: <defaults>
</compile_context>

<pallas_src>
import jax
import jax.numpy as jnp
import numpy as np
from jax.experimental import pallas as pl
from jax.experimental.pallas import tpu as pltpu


# ----------------------------------------------------------------------------
# Kernel
# ----------------------------------------------------------------------------
def make_kernel(N, H, W, Cin, Cout):
    inv_cnt = 1.0 / float(N * H * W)     # BatchNorm reduction count
    eps = 1e-5
    HI = jax.lax.Precision.HIGHEST       # only for the tiny stats aggregation

    def kernel(x_ref, up_ref, dn_ref,
               g1_ref, b1_ref, p1_ref, bw1_ref,
               g2_ref, b2_ref, p2_ref, bw2_ref, out_ref):
        up = up_ref[...]                 # (R, R) 0/1 "row above (same image)"
        dn = dn_ref[...]                 # (R, R) 0/1 "row below (same image)"

        def batchnorm(z, p_ref, g_ref, b_ref):
            # Fused per-lane sum / sum-of-squares, then aggregate lanes of the
            # same channel with one tiny matmul (channel-indicator matrix P).
            s = jnp.sum(z, axis=0, keepdims=True)            # (1, L)
            sq = jnp.sum(z * z, axis=0, keepdims=True)       # (1, L)
            s_ch = jnp.dot(s, p_ref[...],
                           preferred_element_type=jnp.float32, precision=HI)
            sq_ch = jnp.dot(sq, p_ref[...],
                            preferred_element_type=jnp.float32, precision=HI)
            mean = s_ch * inv_cnt
            var = jnp.maximum(sq_ch * inv_cnt - mean * mean, 0.0)
            scale = jax.lax.rsqrt(var + eps) * g_ref[...]
            return (z - mean) * scale + b_ref[...]

        def conv3x3_relu(z, bw_ref):
            # ky = 1: same row; ky = 0 / 2: row above / below via shift matrices.
            acc = jnp.dot(z, bw_ref[1], preferred_element_type=jnp.float32)
            z_up = jnp.dot(up, z, preferred_element_type=jnp.float32)
            acc = acc + jnp.dot(z_up, bw_ref[0], preferred_element_type=jnp.float32)
            z_dn = jnp.dot(dn, z, preferred_element_type=jnp.float32)
            acc = acc + jnp.dot(z_dn, bw_ref[2], preferred_element_type=jnp.float32)
            return jnp.maximum(acc, 0.0)

        x = x_ref[...]                                       # (R, W*Cin)
        y1 = conv3x3_relu(batchnorm(x, p1_ref, g1_ref, b1_ref), bw1_ref)
        out_ref[...] = conv3x3_relu(batchnorm(y1, p2_ref, g2_ref, b2_ref), bw2_ref)

    return kernel


# ----------------------------------------------------------------------------
# One-time parameter repacking (host side, done once per weight set)
# ----------------------------------------------------------------------------
def _banded_conv_weights(w_oihw, W):
    """(Cout, Cin, 3, 3) -> (3, W*Cin, W*Cout) banded lane-mixing matrices."""
    Co, Ci = int(w_oihw.shape[0]), int(w_oihw.shape[1])
    wk = jnp.transpose(w_oihw, (2, 3, 1, 0)).astype(jnp.float32)  # (ky, kx, ci, co)

    rows, cols, kxs, cis, cos = [], [], [], [], []
    for w in range(W):
        for kx in range(3):
            wi = w + kx - 1
            if 0 <= wi < W:
                for ci in range(Ci):
                    for co in range(Co):
                        rows.append(wi * Ci + ci)
                        cols.append(w * Co + co)
                        kxs.append(kx)
                        cis.append(ci)
                        cos.append(co)
    rows = np.asarray(rows)
    cols = np.asarray(cols)
    kxs = np.asarray(kxs)
    cis = np.asarray(cis)
    cos = np.asarray(cos)

    bands = []
    for ky in range(3):
        vals = wk[ky][kxs, cis, cos]
        bands.append(jnp.zeros((W * Ci, W * Co), jnp.float32).at[rows, cols].set(vals))
    return jnp.stack(bands, axis=0)


def _channel_agg_matrix(C, W):
    """(W*C, W*C) 0/1 matrix: P[l, l'] = 1 iff lanes l, l' hold the same channel."""
    lane_ch = np.arange(W * C) % C
    return jnp.asarray((lane_ch[:, None] == lane_ch[None, :]).astype(np.float32))


def _row_shift_matrices(N, H):
    """(R, R) 0/1 matrices: up@z -> row above (zero at image tops), dn@z -> row below."""
    R = N * H
    up = np.zeros((R, R), np.float32)
    dn = np.zeros((R, R), np.float32)
    for r in range(R):
        if r % H != 0:
            up[r, r - 1] = 1.0
        if r % H != H - 1:
            dn[r, r + 1] = 1.0
    return jnp.asarray(up), jnp.asarray(dn)


def prepare_params(gamma1, beta1, w1, gamma2, beta2, w2, N, H, W):
    Cin, Cout = int(w1.shape[1]), int(w1.shape[0])
    Sup, Sdn = _row_shift_matrices(N, H)
    P1 = _channel_agg_matrix(Cin, W)
    P2 = _channel_agg_matrix(Cout, W)
    B1 = _banded_conv_weights(w1, W)
    B2 = _banded_conv_weights(w2, W)
    g1 = jnp.tile(gamma1.astype(jnp.float32), W).reshape(1, W * Cin)
    b1 = jnp.tile(beta1.astype(jnp.float32), W).reshape(1, W * Cin)
    g2 = jnp.tile(gamma2.astype(jnp.float32), W).reshape(1, W * Cout)
    b2 = jnp.tile(beta2.astype(jnp.float32), W).reshape(1, W * Cout)
    return (Sup, Sdn, g1, b1, P1, B1, g2, b2, P2, B2)


# ----------------------------------------------------------------------------
# Wrapper (jitted: in/out transposes fuse around the single pallas_call)
# ----------------------------------------------------------------------------
@jax.jit
def hand_pose_conv_block(x_nchw, params):
    """x_nchw: (N, Cin, H, W) float32 -> (N, Cout, H, W) float32."""
    N, Cin, H, W = x_nchw.shape
    (Sup, Sdn, g1, b1, P1, B1, g2, b2, P2, B2) = params
    Cout = g2.shape[1] // W
    R = N * H

    kernel = make_kernel(N, H, W, Cin, Cout)

    # NCHW -> (N*H, W*Cin): channel fastest in lanes (lane-dense, no padding).
    x2d = jnp.transpose(x_nchw, (0, 2, 3, 1)).reshape(R, W * Cin).astype(jnp.float32)

    vmem = pl.BlockSpec(memory_space=pltpu.MemorySpace.VMEM)
    out2d = pl.pallas_call(
        kernel,
        out_shape=jax.ShapeDtypeStruct((R, W * Cout), jnp.float32),
        in_specs=[vmem] * 11,
        out_specs=vmem,
    )(x2d, Sup, Sdn, g1, b1, P1, B1, g2, b2, P2, B2)

    return jnp.transpose(out2d.reshape(N, H, W, Cout), (0, 3, 1, 2))


# ----------------------------------------------------------------------------
# Pure-JAX reference (training-mode BN, f32-precision convs)
# ----------------------------------------------------------------------------
def reference_forward(x, gamma1, beta1, w1, gamma2, beta2, w2):
    eps = 1e-5

    def bn(x, g, b):
        mu = x.mean(axis=(0, 2, 3), keepdims=True)
        var = x.var(axis=(0, 2, 3), keepdims=True)   # biased, like PyTorch norm
        return ((x - mu) * jax.lax.rsqrt(var + eps)
                * g.reshape(1, -1, 1, 1) + b.reshape(1, -1, 1, 1))

    def conv(x, w):
        return jax.lax.conv_general_dilated(
            x, w, (1, 1), 'SAME',
            dimension_numbers=('NCHW', 'OIHW', 'NCHW'),
            precision=jax.lax.Precision.HIGHEST)

    y = jax.nn.relu(conv(bn(x, gamma1, beta1), w1))
    y = jax.nn.relu(conv(bn(y, gamma2, beta2), w2))
    return y


if __name__ == "__main__":
    N, Cin, Cout, H, W = 2, 4, 8, 16, 16

    key = jax.random.PRNGKey(0)
    kx_, k1, k2, k3, k4, k5, k6 = jax.random.split(key, 7)

    x = jax.random.normal(kx_, (N, Cin, H, W), jnp.float32)
    gamma1 = 1.0 + 0.1 * jax.random.normal(k1, (Cin,), jnp.float32)
    beta1 = 0.1 * jax.random.normal(k2, (Cin,), jnp.float32)
    w1 = 0.3 * jax.random.normal(k3, (Cout, Cin, 3, 3), jnp.float32)
    gamma2 = 1.0 + 0.1 * jax.random.normal(k4, (Cout,), jnp.float32)
    beta2 = 0.1 * jax.random.normal(k5, (Cout,), jnp.float32)
    w2 = 0.3 * jax.random.normal(k6, (Cout, Cout, 3, 3), jnp.float32)

    params = prepare_params(gamma1, beta1, w1, gamma2, beta2, w2, N, H, W)

    out = hand_pose_conv_block(x, params)
    out = jax.block_until_ready(out)

    ref = jax.block_until_ready(
        reference_forward(x, gamma1, beta1, w1, gamma2, beta2, w2))

    assert out.shape == (N, Cout, H, W), out.shape
    max_err = float(jnp.max(jnp.abs(out - ref)))
    # Conv matmuls run at default (bf16-input) MXU precision per the perf
    # review; 5e-2 leaves ~2x margin over the expected worst-element rounding
    # error accumulated across the two conv layers.
    assert max_err < 5e-2, f"max abs error too large: {max_err}"

    print("KERNEL_OK")
</pallas_src>

<mosaic_0001>
module attributes {stable_mosaic.version = 11 : i64} {
  func.func @kernel(%arg0: memref<32x64xf32, #tpu.memory_space<vmem>>, %arg1: memref<32x32xf32, #tpu.memory_space<vmem>>, %arg2: memref<32x32xf32, #tpu.memory_space<vmem>>, %arg3: memref<1x64xf32, #tpu.memory_space<vmem>>, %arg4: memref<1x64xf32, #tpu.memory_space<vmem>>, %arg5: memref<64x64xf32, #tpu.memory_space<vmem>>, %arg6: memref<3x64x128xf32, #tpu.memory_space<vmem>>, %arg7: memref<1x128xf32, #tpu.memory_space<vmem>>, %arg8: memref<1x128xf32, #tpu.memory_space<vmem>>, %arg9: memref<128x128xf32, #tpu.memory_space<vmem>>, %arg10: memref<3x128x128xf32, #tpu.memory_space<vmem>>, %arg11: memref<32x128xf32, #tpu.memory_space<vmem>>) attributes {dimension_semantics = [], scalar_prefetch = 0 : i64, scratch_operands = 0 : i64, tpu.core_type = #tpu.core_type<tc>} {
    %c0 = arith.constant 0 : index
    %c0_0 = arith.constant 0 : index
    %0 = vector.load %arg1[%c0, %c0_0] : memref<32x32xf32, #tpu.memory_space<vmem>>, vector<32x32xf32>
    %c0_1 = arith.constant 0 : index
    %c0_2 = arith.constant 0 : index
    %1 = vector.load %arg2[%c0_1, %c0_2] : memref<32x32xf32, #tpu.memory_space<vmem>>, vector<32x32xf32>
    %c0_3 = arith.constant 0 : index
    %c0_4 = arith.constant 0 : index
    %2 = vector.load %arg0[%c0_3, %c0_4] : memref<32x64xf32, #tpu.memory_space<vmem>>, vector<32x64xf32>
    %cst = arith.constant dense<0.000000e+00> : vector<64xf32>
    %3 = vector.multi_reduction <add>, %2, %cst [0] : vector<32x64xf32> to vector<64xf32>
    %4 = vector.shape_cast %3 : vector<64xf32> to vector<1x64xf32>
    %5 = arith.mulf %2, %2 : vector<32x64xf32>
    %cst_5 = arith.constant dense<0.000000e+00> : vector<64xf32>
    %6 = vector.multi_reduction <add>, %5, %cst_5 [0] : vector<32x64xf32> to vector<64xf32>
    %7 = vector.shape_cast %6 : vector<64xf32> to vector<1x64xf32>
    %c0_6 = arith.constant 0 : index
    %c0_7 = arith.constant 0 : index
    %8 = vector.load %arg5[%c0_6, %c0_7] : memref<64x64xf32, #tpu.memory_space<vmem>>, vector<64x64xf32>
    %cst_8 = arith.constant dense<0.000000e+00> : vector<1x64xf32>
    %9 = tpu.matmul %4, %8, %cst_8 {dimension_numbers = #tpu.dot_dimension_numbers<[1], [0], [0], [1], [0, 0, 1, 1], [], []>, precision = #tpu.contract_precision<fp32>} : vector<1x64xf32>, vector<64x64xf32>, vector<1x64xf32> -> vector<1x64xf32>
    %c0_9 = arith.constant 0 : index
    %c0_10 = arith.constant 0 : index
    %10 = vector.load %arg5[%c0_9, %c0_10] : memref<64x64xf32, #tpu.memory_space<vmem>>, vector<64x64xf32>
    %cst_11 = arith.constant dense<0.000000e+00> : vector<1x64xf32>
    %11 = tpu.matmul %7, %10, %cst_11 {dimension_numbers = #tpu.dot_dimension_numbers<[1], [0], [0], [1], [0, 0, 1, 1], [], []>, precision = #tpu.contract_precision<fp32>} : vector<1x64xf32>, vector<64x64xf32>, vector<1x64xf32> -> vector<1x64xf32>
    %cst_12 = arith.constant 0.001953125 : f32
    %12 = vector.broadcast %cst_12 : f32 to vector<1x64xf32>
    %13 = arith.mulf %9, %12 : vector<1x64xf32>
    %cst_13 = arith.constant 0.001953125 : f32
    %14 = vector.broadcast %cst_13 : f32 to vector<1x64xf32>
    %15 = arith.mulf %11, %14 : vector<1x64xf32>
    %16 = arith.mulf %13, %13 : vector<1x64xf32>
    %17 = arith.subf %15, %16 : vector<1x64xf32>
    %cst_14 = arith.constant 0.000000e+00 : f32
    %18 = vector.broadcast %cst_14 : f32 to vector<1x64xf32>
    %19 = arith.maximumf %17, %18 : vector<1x64xf32>
    %cst_15 = arith.constant 9.99999974E-6 : f32
    %20 = vector.broadcast %cst_15 : f32 to vector<1x64xf32>
    %21 = arith.addf %19, %20 : vector<1x64xf32>
    %22 = math.rsqrt %21 : vector<1x64xf32>
    %c0_16 = arith.constant 0 : index
    %c0_17 = arith.constant 0 : index
    %23 = vector.load %arg3[%c0_16, %c0_17] : memref<1x64xf32, #tpu.memory_space<vmem>>, vector<1x64xf32>
    %24 = arith.mulf %22, %23 : vector<1x64xf32>
    %25 = vector.broadcast %13 : vector<1x64xf32> to vector<32x64xf32>
    %26 = arith.subf %2, %25 : vector<32x64xf32>
    %27 = vector.broadcast %24 : vector<1x64xf32> to vector<32x64xf32>
    %28 = arith.mulf %26, %27 : vector<32x64xf32>
    %c0_18 = arith.constant 0 : index
    %c0_19 = arith.constant 0 : index
    %29 = vector.load %arg4[%c0_18, %c0_19] : memref<1x64xf32, #tpu.memory_space<vmem>>, vector<1x64xf32>
    %30 = vector.broadcast %29 : vector<1x64xf32> to vector<32x64xf32>
    %31 = arith.addf %28, %30 : vector<32x64xf32>
    %c1 = arith.constant 1 : index
    %c0_20 = arith.constant 0 : index
    %c0_21 = arith.constant 0 : index
    %32 = vector.load %arg6[%c1, %c0_20, %c0_21] : memref<3x64x128xf32, #tpu.memory_space<vmem>>, vector<1x64x128xf32>
    %33 = vector.shape_cast %32 : vector<1x64x128xf32> to vector<64x128xf32>
    %cst_22 = arith.constant dense<0.000000e+00> : vector<32x128xf32>
    %34 = tpu.matmul %31, %33, %cst_22 {dimension_numbers = #tpu.dot_dimension_numbers<[1], [0], [0], [1], [0, 0, 1, 1], [], []>} : vector<32x64xf32>, vector<64x128xf32>, vector<32x128xf32> -> vector<32x128xf32>
    %cst_23 = arith.constant dense<0.000000e+00> : vector<32x64xf32>
    %35 = tpu.matmul %0, %31, %cst_23 {dimension_numbers = #tpu.dot_dimension_numbers<[1], [0], [0], [1], [0, 0, 1, 1], [], []>} : vector<32x32xf32>, vector<32x64xf32>, vector<32x64xf32> -> vector<32x64xf32>
    %c0_24 = arith.constant 0 : index
    %c0_25 = arith.constant 0 : index
    %c0_26 = arith.constant 0 : index
    %36 = vector.load %arg6[%c0_24, %c0_25, %c0_26] : memref<3x64x128xf32, #tpu.memory_space<vmem>>, vector<1x64x128xf32>
    %37 = vector.shape_cast %36 : vector<1x64x128xf32> to vector<64x128xf32>
    %cst_27 = arith.constant dense<0.000000e+00> : vector<32x128xf32>
    %38 = tpu.matmul %35, %37, %cst_27 {dimension_numbers = #tpu.dot_dimension_numbers<[1], [0], [0], [1], [0, 0, 1, 1], [], []>} : vector<32x64xf32>, vector<64x128xf32>, vector<32x128xf32> -> vector<32x128xf32>
    %39 = arith.addf %34, %38 : vector<32x128xf32>
    %cst_28 = arith.constant dense<0.000000e+00> : vector<32x64xf32>
    %40 = tpu.matmul %1, %31, %cst_28 {dimension_numbers = #tpu.dot_dimension_numbers<[1], [0], [0], [1], [0, 0, 1, 1], [], []>} : vector<32x32xf32>, vector<32x64xf32>, vector<32x64xf32> -> vector<32x64xf32>
    %c2 = arith.constant 2 : index
    %c0_29 = arith.constant 0 : index
    %c0_30 = arith.constant 0 : index
    %41 = vector.load %arg6[%c2, %c0_29, %c0_30] : memref<3x64x128xf32, #tpu.memory_space<vmem>>, vector<1x64x128xf32>
    %42 = vector.shape_cast %41 : vector<1x64x128xf32> to vector<64x128xf32>
    %cst_31 = arith.constant dense<0.000000e+00> : vector<32x128xf32>
    %43 = tpu.matmul %40, %42, %cst_31 {dimension_numbers = #tpu.dot_dimension_numbers<[1], [0], [0], [1], [0, 0, 1, 1], [], []>} : vector<32x64xf32>, vector<64x128xf32>, vector<32x128xf32> -> vector<32x128xf32>
    %44 = arith.addf %39, %43 : vector<32x128xf32>
    %cst_32 = arith.constant 0.000000e+00 : f32
    %45 = vector.broadcast %cst_32 : f32 to vector<32x128xf32>
    %46 = arith.maximumf %44, %45 : vector<32x128xf32>
    %cst_33 = arith.constant dense<0.000000e+00> : vector<128xf32>
    %47 = vector.multi_reduction <add>, %46, %cst_33 [0] : vector<32x128xf32> to vector<128xf32>
    %48 = vector.shape_cast %47 : vector<128xf32> to vector<1x128xf32>
    %49 = arith.mulf %46, %46 : vector<32x128xf32>
    %cst_34 = arith.constant dense<0.000000e+00> : vector<128xf32>
    %50 = vector.multi_reduction <add>, %49, %cst_34 [0] : vector<32x128xf32> to vector<128xf32>
    %51 = vector.shape_cast %50 : vector<128xf32> to vector<1x128xf32>
    %c0_35 = arith.constant 0 : index
    %c0_36 = arith.constant 0 : index
    %52 = vector.load %arg9[%c0_35, %c0_36] : memref<128x128xf32, #tpu.memory_space<vmem>>, vector<128x128xf32>
    %cst_37 = arith.constant dense<0.000000e+00> : vector<1x128xf32>
    %53 = tpu.matmul %48, %52, %cst_37 {dimension_numbers = #tpu.dot_dimension_numbers<[1], [0], [0], [1], [0, 0, 1, 1], [], []>, precision = #tpu.contract_precision<fp32>} : vector<1x128xf32>, vector<128x128xf32>, vector<1x128xf32> -> vector<1x128xf32>
    %c0_38 = arith.constant 0 : index
    %c0_39 = arith.constant 0 : index
    %54 = vector.load %arg9[%c0_38, %c0_39] : memref<128x128xf32, #tpu.memory_space<vmem>>, vector<128x128xf32>
    %cst_40 = arith.constant dense<0.000000e+00> : vector<1x128xf32>
    %55 = tpu.matmul %51, %54, %cst_40 {dimension_numbers = #tpu.dot_dimension_numbers<[1], [0], [0], [1], [0, 0, 1, 1], [], []>, precision = #tpu.contract_precision<fp32>} : vector<1x128xf32>, vector<128x128xf32>, vector<1x128xf32> -> vector<1x128xf32>
    %cst_41 = arith.constant 0.001953125 : f32
    %56 = vector.broadcast %cst_41 : f32 to vector<1x128xf32>
    %57 = arith.mulf %53, %56 : vector<1x128xf32>
    %cst_42 = arith.constant 0.001953125 : f32
    %58 = vector.broadcast %cst_42 : f32 to vector<1x128xf32>
    %59 = arith.mulf %55, %58 : vector<1x128xf32>
    %60 = arith.mulf %57, %57 : vector<1x128xf32>
    %61 = arith.subf %59, %60 : vector<1x128xf32>
    %cst_43 = arith.constant 0.000000e+00 : f32
    %62 = vector.broadcast %cst_43 : f32 to vector<1x128xf32>
    %63 = arith.maximumf %61, %62 : vector<1x128xf32>
    %cst_44 = arith.constant 9.99999974E-6 : f32
    %64 = vector.broadcast %cst_44 : f32 to vector<1x128xf32>
    %65 = arith.addf %63, %64 : vector<1x128xf32>
    %66 = math.rsqrt %65 : vector<1x128xf32>
    %c0_45 = arith.constant 0 : index
    %c0_46 = arith.constant 0 : index
    %67 = vector.load %arg7[%c0_45, %c0_46] : memref<1x128xf32, #tpu.memory_space<vmem>>, vector<1x128xf32>
    %68 = arith.mulf %66, %67 : vector<1x128xf32>
    %69 = vector.broadcast %57 : vector<1x128xf32> to vector<32x128xf32>
    %70 = arith.subf %46, %69 : vector<32x128xf32>
    %71 = vector.broadcast %68 : vector<1x128xf32> to vector<32x128xf32>
    %72 = arith.mulf %70, %71 : vector<32x128xf32>
    %c0_47 = arith.constant 0 : index
    %c0_48 = arith.constant 0 : index
    %73 = vector.load %arg8[%c0_47, %c0_48] : memref<1x128xf32, #tpu.memory_space<vmem>>, vector<1x128xf32>
    %74 = vector.broadcast %73 : vector<1x128xf32> to vector<32x128xf32>
    %75 = arith.addf %72, %74 : vector<32x128xf32>
    %c1_49 = arith.constant 1 : index
    %c0_50 = arith.constant 0 : index
    %c0_51 = arith.constant 0 : index
    %76 = vector.load %arg10[%c1_49, %c0_50, %c0_51] : memref<3x128x128xf32, #tpu.memory_space<vmem>>, vector<1x128x128xf32>
    %77 = vector.shape_cast %76 : vector<1x128x128xf32> to vector<128x128xf32>
    %cst_52 = arith.constant dense<0.000000e+00> : vector<32x128xf32>
    %78 = tpu.matmul %75, %77, %cst_52 {dimension_numbers = #tpu.dot_dimension_numbers<[1], [0], [0], [1], [0, 0, 1, 1], [], []>} : vector<32x128xf32>, vector<128x128xf32>, vector<32x128xf32> -> vector<32x128xf32>
    %cst_53 = arith.constant dense<0.000000e+00> : vector<32x128xf32>
    %79 = tpu.matmul %0, %75, %cst_53 {dimension_numbers = #tpu.dot_dimension_numbers<[1], [0], [0], [1], [0, 0, 1, 1], [], []>} : vector<32x32xf32>, vector<32x128xf32>, vector<32x128xf32> -> vector<32x128xf32>
    %c0_54 = arith.constant 0 : index
    %c0_55 = arith.constant 0 : index
    %c0_56 = arith.constant 0 : index
    %80 = vector.load %arg10[%c0_54, %c0_55, %c0_56] : memref<3x128x128xf32, #tpu.memory_space<vmem>>, vector<1x128x128xf32>
    %81 = vector.shape_cast %80 : vector<1x128x128xf32> to vector<128x128xf32>
    %cst_57 = arith.constant dense<0.000000e+00> : vector<32x128xf32>
    %82 = tpu.matmul %79, %81, %cst_57 {dimension_numbers = #tpu.dot_dimension_numbers<[1], [0], [0], [1], [0, 0, 1, 1], [], []>} : vector<32x128xf32>, vector<128x128xf32>, vector<32x128xf32> -> vector<32x128xf32>
    %83 = arith.addf %78, %82 : vector<32x128xf32>
    %cst_58 = arith.constant dense<0.000000e+00> : vector<32x128xf32>
    %84 = tpu.matmul %1, %75, %cst_58 {dimension_numbers = #tpu.dot_dimension_numbers<[1], [0], [0], [1], [0, 0, 1, 1], [], []>} : vector<32x32xf32>, vector<32x128xf32>, vector<32x128xf32> -> vector<32x128xf32>
    %c2_59 = arith.constant 2 : index
    %c0_60 = arith.constant 0 : index
    %c0_61 = arith.constant 0 : index
    %85 = vector.load %arg10[%c2_59, %c0_60, %c0_61] : memref<3x128x128xf32, #tpu.memory_space<vmem>>, vector<1x128x128xf32>
    %86 = vector.shape_cast %85 : vector<1x128x128xf32> to vector<128x128xf32>
    %cst_62 = arith.constant dense<0.000000e+00> : vector<32x128xf32>
    %87 = tpu.matmul %84, %86, %cst_62 {dimension_numbers = #tpu.dot_dimension_numbers<[1], [0], [0], [1], [0, 0, 1, 1], [], []>} : vector<32x128xf32>, vector<128x128xf32>, vector<32x128xf32> -> vector<32x128xf32>
    %88 = arith.addf %83, %87 : vector<32x128xf32>
    %cst_63 = arith.constant 0.000000e+00 : f32
    %89 = vector.broadcast %cst_63 : f32 to vector<32x128xf32>
    %90 = arith.maximumf %88, %89 : vector<32x128xf32>
    %c0_64 = arith.constant 0 : index
    %c0_65 = arith.constant 0 : index
    %91 = vector.load %arg11[%c0_64, %c0_65] : memref<32x128xf32, #tpu.memory_space<vmem>>, vector<32x128xf32>
    tpu.vector_store %arg11[%c0_64, %c0_65], %90 {strides = array<i32>} : memref<32x128xf32, #tpu.memory_space<vmem>>, vector<32x128xf32>,
    return
  }
}

</mosaic_0001>

<llo_original>
// kernel: hand_pose_conv_block.1
$region0: #{hand_pose_conv_block.1}
  #allocation0 [shape = 'u32[]', space=smem, size = 0x4, offset = 0x4, fixed_abs, tag = 'smem constant byte address 0x4 - core index']
  #allocation1 [shape = 'u32[72,128]{1,0:T(1,128)}', space=vmem, size = 0x9000, scoped, tag = 'internal scratch']
  %s0 = inlined_call_operand.vmem [shape: f32[32,64], index: 0, kind: input, shape index: {}]
  %s1 = inlined_call_operand.vmem [shape: f32[32,32], index: 1, kind: input, shape index: {}]
  %s2 = inlined_call_operand.hbm [shape: f32[32,32], index: 2, kind: input, shape index: {}]
  %s3 = inlined_call_operand.vmem [shape: f32[1,64], index: 3, kind: input, shape index: {}]
  %s4 = inlined_call_operand.vmem [shape: f32[1,64], index: 4, kind: input, shape index: {}]
  %s5 = inlined_call_operand.hbm [shape: f32[64,64], index: 5, kind: input, shape index: {}]
  %s6 = inlined_call_operand.hbm [shape: f32[3,64,128], index: 6, kind: input, shape index: {}]
  %s7 = inlined_call_operand.vmem [shape: f32[1,128], index: 7, kind: input, shape index: {}]
  %s8 = inlined_call_operand.vmem [shape: f32[1,128], index: 8, kind: input, shape index: {}]
  %s9 = inlined_call_operand.vmem [shape: f32[128,128], index: 9, kind: input, shape index: {}]
  %s10 = inlined_call_operand.vmem [shape: f32[3,128,128], index: 10, kind: input, shape index: {}]
  %s11 = inlined_call_operand.vmem [shape: f32[32,128], index: 11, kind: output, shape index: {}]
  %s12 = sld [smem:[#allocation0]]
  $region66: #{hand_pose_conv_block.1} parent=0
    _
  %s14 = ssub.s32 1, %s12
  %s15 = scalar_select 0, %s14, %s12
  $region1: #{hand_pose_conv_block.1} parent=0
    #allocation2 [shape = 'u8[16384]{0}', space=vmem, size = 0x4000, scoped, tag = 'input window, operand 2, single buffered']
    #allocation3 [shape = 's32[1]{0}', space=sflag, size = 0x4, scoped, tag = 'scoped memory for hand_pose_conv_block.1']
    #allocation4 [shape = 'u8[32768]{0}', space=vmem, size = 0x8000, scoped, tag = 'input window, operand 5, single buffered']
    #allocation5 [shape = 's32[1]{0}', space=sflag, size = 0x4, scoped, tag = 'scoped memory for hand_pose_conv_block.1']
    #allocation6 [shape = 'u8[98304]{0}', space=vmem, size = 0x18000, scoped, tag = 'input window, operand 6, single buffered']
    %16 = vsyncpa [#allocation3], 0
    %17 = vsyncpa [#allocation5], 0
    // Predicated region
    $region2: #{hand_pose_conv_block.1} parent=1 // pred_check
      _
    $region3: #{hand_pose_conv_block.1} parent=1 // pred_check_branch
      %19 = sbr.rel (0) target = $region5
    $region4: #{hand_pose_conv_block.1} parent=1 // pred_region
      _
    $region5: #{hand_pose_conv_block.1} parent=1 // pred_fallthru
      _
    // Predicated region
    $region6: #{hand_pose_conv_block.1} parent=1 // pred_check
      _
    $region7: #{hand_pose_conv_block.1} parent=1 // pred_check_branch
      %21 = sbr.rel (0) target = $region9
    $region8: #{hand_pose_conv_block.1} parent=1 // pred_region
      _
    $region9: #{hand_pose_conv_block.1} parent=1 // pred_fallthru
      _
    // Predicated region
    $region10: #{hand_pose_conv_block.1} parent=1 // pred_check
      _
    $region11: #{hand_pose_conv_block.1} parent=1 // pred_check_branch
      %23 = sbr.rel (0) target = $region13
    $region12: #{hand_pose_conv_block.1} parent=1 // pred_region
      %25 = vsyncadd [#allocation3], 0
      %s26 = sshll.u32 %s2, 4
      %s27 = int_to_ptr.hbm [resolvable:$true] %s26
      %s28 = sshll.u32 [#allocation2], 4
      %s29 = int_to_ptr.vmem [resolvable:$true] %s28
      %34 = dma.hbm_to_vmem [thread:$0]  %s27, 512, %s29, [#allocation3], 128, 128, 8
    $region13: #{hand_pose_conv_block.1} parent=1 // pred_fallthru
      _
    // Predicated region
    $region14: #{hand_pose_conv_block.1} parent=1 // pred_check
      _
    $region15: #{hand_pose_conv_block.1} parent=1 // pred_check_branch
      %36 = sbr.rel (0) target = $region17
    $region16: #{hand_pose_conv_block.1} parent=1 // pred_region
      _
    $region17: #{hand_pose_conv_block.1} parent=1 // pred_fallthru
      _
    // Predicated region
    $region18: #{hand_pose_conv_block.1} parent=1 // pred_check
      _
    $region19: #{hand_pose_conv_block.1} parent=1 // pred_check_branch
      %38 = sbr.rel (0) target = $region21
    $region20: #{hand_pose_conv_block.1} parent=1 // pred_region
      _
    $region21: #{hand_pose_conv_block.1} parent=1 // pred_fallthru
      _
    // Predicated region
    $region22: #{hand_pose_conv_block.1} parent=1 // pred_check
      _
    $region23: #{hand_pose_conv_block.1} parent=1 // pred_check_branch
      %40 = sbr.rel (0) target = $region25
    $region24: #{hand_pose_conv_block.1} parent=1 // pred_region
      %42 = vsyncadd [#allocation5], 0
      %s43 = sshll.u32 %s5, 4
      %s44 = int_to_ptr.hbm [resolvable:$true] %s43
      %s45 = sshll.u32 [#allocation4], 4
      %s46 = int_to_ptr.vmem [resolvable:$true] %s45
      %51 = dma.hbm_to_vmem [thread:$0]  %s44, 1024, %s46, [#allocation5], 128, 128, 8
    $region25: #{hand_pose_conv_block.1} parent=1 // pred_fallthru
      _
    // Predicated region
    $region26: #{hand_pose_conv_block.1} parent=1 // pred_check
      _
    $region27: #{hand_pose_conv_block.1} parent=1 // pred_check_branch
      %53 = sbr.rel (0) target = $region29
    $region28: #{hand_pose_conv_block.1} parent=1 // pred_region
      %55 = vsyncadd [#allocation5], 0
      %s56 = sshll.u32 %s6, 4
      %s57 = int_to_ptr.hbm [resolvable:$true] %s56
      %s58 = sshll.u32 [#allocation6], 4
      %s59 = int_to_ptr.vmem [resolvable:$true] %s58
      %64 = dma.hbm_to_vmem [thread:$0]  %s57, 3072, %s59, [#allocation5], 128, 128, 8
    $region29: #{hand_pose_conv_block.1} parent=1 // pred_fallthru
      _
    // Predicated region
    $region30: #{hand_pose_conv_block.1} parent=1 // pred_check
      _
    $region31: #{hand_pose_conv_block.1} parent=1 // pred_check_branch
      %66 = sbr.rel (0) target = $region33
    $region32: #{hand_pose_conv_block.1} parent=1 // pred_region
      _
    $region33: #{hand_pose_conv_block.1} parent=1 // pred_fallthru
      _
    // Predicated region
    $region34: #{hand_pose_conv_block.1} parent=1 // pred_check
      _
    $region35: #{hand_pose_conv_block.1} parent=1 // pred_check_branch
      %68 = sbr.rel (0) target = $region37
    $region36: #{hand_pose_conv_block.1} parent=1 // pred_region
      _
    $region37: #{hand_pose_conv_block.1} parent=1 // pred_fallthru
      _
    // Predicated region
    $region38: #{hand_pose_conv_block.1} parent=1 // pred_check
      _
    $region39: #{hand_pose_conv_block.1} parent=1 // pred_check_branch
      %70 = sbr.rel (0) target = $region41
    $region40: #{hand_pose_conv_block.1} parent=1 // pred_region
      _
    $region41: #{hand_pose_conv_block.1} parent=1 // pred_fallthru
      _
    // Predicated region
    $region42: #{hand_pose_conv_block.1} parent=1 // pred_check
      _
    $region43: #{hand_pose_conv_block.1} parent=1 // pred_check_branch
      %72 = sbr.rel (0) target = $region45
    $region44: #{hand_pose_conv_block.1} parent=1 // pred_region
      _
    $region45: #{hand_pose_conv_block.1} parent=1 // pred_fallthru
      _
    // Predicated region
    $region46: #{hand_pose_conv_block.1} parent=1 // pred_check
      _
    $region47: #{hand_pose_conv_block.1} parent=1 // pred_check_branch
      %74 = sbr.rel (0) target = $region49
    $region48: #{hand_pose_conv_block.1} parent=1 // pred_region
      %76 = dma.done [#allocation3], 512
    $region49: #{hand_pose_conv_block.1} parent=1 // pred_fallthru
      _
    // Predicated region
    $region50: #{hand_pose_conv_block.1} parent=1 // pred_check
      _
    $region51: #{hand_pose_conv_block.1} parent=1 // pred_check_branch
      %78 = sbr.rel (0) target = $region53
    $region52: #{hand_pose_conv_block.1} parent=1 // pred_region
      %80 = dma.done [#allocation5], 1024
    $region53: #{hand_pose_conv_block.1} parent=1 // pred_fallthru
      _
    // Predicated region
    $region54: #{hand_pose_conv_block.1} parent=1 // pred_check
      _
    $region55: #{hand_pose_conv_block.1} parent=1 // pred_check_branch
      %82 = sbr.rel (0) target = $region57
    $region56: #{hand_pose_conv_block.1} parent=1 // pred_region
      %84 = dma.done [#allocation5], 3072
    $region57: #{hand_pose_conv_block.1} parent=1 // pred_fallthru
      _
    %v85 = vld [vmem:[%s1] sm:$0xff]
    %v86 = vld [vmem:[%s1 + $0x8] sm:$0xff]
    %v87 = vld [vmem:[%s1 + $0x10] sm:$0xff]
    %v88 = vld [vmem:[%s1 + $0x18] sm:$0xff]
    %v89 = vld [vmem:[#allocation2] sm:$0xff]
    %v90 = vld [vmem:[#allocation2 + $0x8] sm:$0xff]
    %v91 = vld [vmem:[#allocation2 + $0x10] sm:$0xff]
    %v92 = vld [vmem:[#allocation2 + $0x18] sm:$0xff]
    %v93 = vld [vmem:[%s0] sm:$0xff]
    %v94 = vld [vmem:[%s0 + $0x8] sm:$0xff]
    %v95 = vld [vmem:[%s0 + $0x10] sm:$0xff]
    %v96 = vld [vmem:[%s0 + $0x18] sm:$0xff]
    %vm97 = vcmask 523264
    %v98 = vsel %vm97, %v93, 0.0
    %v99 = vsel %vm97, %v94, 0.0
    %v100 = vadd.f32 %v98, %v99
    %v101 = vsel %vm97, %v95, 0.0
    %v102 = vadd.f32 %v100, %v101
    %v103 = vsel %vm97, %v96, 0.0
    %v104 = vadd.f32 %v102, %v103
    %v105 = vrot.slane %v104, 4
    %v106 = vadd.f32 %v104, %v105
    %v107 = vrot.slane %v106, 2
    %v108 = vadd.f32 %v106, %v107
    %v109 = vrot.slane %v108, 1
    %v110 = vadd.f32 %v108, %v109
    %v111 = vmul.f32 %v93, %v93
    %v112 = vmul.f32 %v94, %v94
    %v113 = vmul.f32 %v95, %v95
    %v114 = vmul.f32 %v96, %v96
    %v115 = vsel %vm97, %v111, 0.0
    %v116 = vsel %vm97, %v112, 0.0
    %v117 = vadd.f32 %v115, %v116
    %v118 = vsel %vm97, %v113, 0.0
    %v119 = vadd.f32 %v117, %v118
    %v120 = vsel %vm97, %v114, 0.0
    %v121 = vadd.f32 %v119, %v120
    %v122 = vrot.slane %v121, 4
    %v123 = vadd.f32 %v121, %v122
    %v124 = vrot.slane %v123, 2
    %v125 = vadd.f32 %v123, %v124
    %v126 = vrot.slane %v125, 1
    %v127 = vadd.f32 %v125, %v126
    %v128 = vld [vmem:[#allocation4] sm:$0xff]
    %v129 = vld [vmem:[#allocation4 + $0x8] sm:$0xff]
    %v130 = vld [vmem:[#allocation4 + $0x10] sm:$0xff]
    %v131 = vld [vmem:[#allocation4 + $0x18] sm:$0xff]
    %v132 = vld [vmem:[#allocation4 + $0x20] sm:$0xff]
    %v133 = vld [vmem:[#allocation4 + $0x28] sm:$0xff]
    %v134 = vld [vmem:[#allocation4 + $0x30] sm:$0xff]
    %v135 = vld [vmem:[#allocation4 + $0x38] sm:$0xff]
    %v137 = vsel %vm97, %v110, 0
    %139 = vmatpush.msra.mxu0 0.0
    %140 = vmatpush.msra.mxu0 0.0
    %141 = vmatpush.msra.mxu0 0.0
    %142 = vmatpush.msra.mxu0 0.0
    %143 = vmatpush.msra.mxu0 0.0
    %144 = vmatpush.msra.mxu0 0.0
    %145 = vmatpush.msra.mxu0 0.0
    %146 = vmatpush.msra.mxu0 0.0
    %v147 = vand.u32 %v135, 4294901760
    %148 = vmatpush.msra.mxu0 %v147
    %v149 = vand.u32 %v134, 4294901760
    %150 = vmatpush.msra.mxu0 %v149
    %v151 = vand.u32 %v133, 4294901760
    %152 = vmatpush.msra.mxu0 %v151
    %v153 = vand.u32 %v132, 4294901760
    %154 = vmatpush.msra.mxu0 %v153
    %v155 = vand.u32 %v131, 4294901760
    %156 = vmatpush.msra.mxu0 %v155
    %v157 = vand.u32 %v130, 4294901760
    %158 = vmatpush.msra.mxu0 %v157
    %v159 = vand.u32 %v129, 4294901760
    %160 = vmatpush.msra.mxu0 %v159
    %v161 = vand.u32 %v128, 4294901760
    %162 = vmatpush.msra.mxu0 %v161
    %v163 = vand.u32 %v137, 4294901760
    %v164 = vsub.f32 %v137, %v163
    %v165 = vand.u32 %v164, 4294901760
    %v166 = vsub.f32 %v164, %v165
    %v167 = vand.u32 %v166, 4294901760
    %168 = vmatmul.f32.gmra.mxu0 %v167
    %v169 = vpop.f32.mrf.mxu0
    %v170 = vadd.f32 0.0, %v169
    %171 = vdwg.mxu0
    %172 = vmatpush.msra.mxu0 0.0
    %173 = vmatpush.msra.mxu0 0.0
    %174 = vmatpush.msra.mxu0 0.0
    %175 = vmatpush.msra.mxu0 0.0
    %176 = vmatpush.msra.mxu0 0.0
    %177 = vmatpush.msra.mxu0 0.0
    %178 = vmatpush.msra.mxu0 0.0
    %179 = vmatpush.msra.mxu0 0.0
    %v180 = vand.u32 %v135, 4294901760
    %v181 = vsub.f32 %v135, %v180
    %v182 = vand.u32 %v181, 4294901760
    %v183 = vsub.f32 %v181, %v182
    %v184 = vand.u32 %v183, 4294901760
    %185 = vmatpush.msra.mxu0 %v184
    %v186 = vand.u32 %v134, 4294901760
    %v187 = vsub.f32 %v134, %v186
    %v188 = vand.u32 %v187, 4294901760
    %v189 = vsub.f32 %v187, %v188
    %v190 = vand.u32 %v189, 4294901760
    %191 = vmatpush.msra.mxu0 %v190
    %v192 = vand.u32 %v133, 4294901760
    %v193 = vsub.f32 %v133, %v192
    %v194 = vand.u32 %v193, 4294901760
    %v195 = vsub.f32 %v193, %v194
    %v196 = vand.u32 %v195, 4294901760
    %197 = vmatpush.msra.mxu0 %v196
    %v198 = vand.u32 %v132, 4294901760
    %v199 = vsub.f32 %v132, %v198
    %v200 = vand.u32 %v199, 4294901760
    %v201 = vsub.f32 %v199, %v200
    %v202 = vand.u32 %v201, 4294901760
    %203 = vmatpush.msra.mxu0 %v202
    %v204 = vand.u32 %v131, 4294901760
    %v205 = vsub.f32 %v131, %v204
    %v206 = vand.u32 %v205, 4294901760
    %v207 = vsub.f32 %v205, %v206
    %v208 = vand.u32 %v207, 4294901760
    %209 = vmatpush.msra.mxu0 %v208
    %v210 = vand.u32 %v130, 4294901760
    %v211 = vsub.f32 %v130, %v210
    %v212 = vand.u32 %v211, 4294901760
    %v213 = vsub.f32 %v211, %v212
    %v214 = vand.u32 %v213, 4294901760
    %215 = vmatpush.msra.mxu0 %v214
    %v216 = vand.u32 %v129, 4294901760
    %v217 = vsub.f32 %v129, %v216
    %v218 = vand.u32 %v217, 4294901760
    %v219 = vsub.f32 %v217, %v218
    %v220 = vand.u32 %v219, 4294901760
    %221 = vmatpush.msra.mxu0 %v220
    %v222 = vand.u32 %v128, 4294901760
    %v223 = vsub.f32 %v128, %v222
    %v224 = vand.u32 %v223, 4294901760
    %v225 = vsub.f32 %v223, %v224
    %v226 = vand.u32 %v225, 4294901760
    %227 = vmatpush.msra.mxu0 %v226
    %v228 = vand.u32 %v137, 4294901760
    %229 = vmatmul.f32.gmra.mxu0 %v228
    %v230 = vpop.f32.mrf.mxu0
    %v231 = vadd.f32 %v170, %v230
    %232 = vdwg.mxu0
    %233 = vmatpush.msra.mxu0 0.0
    %234 = vmatpush.msra.mxu0 0.0
    %235 = vmatpush.msra.mxu0 0.0
    %236 = vmatpush.msra.mxu0 0.0
    %237 = vmatpush.msra.mxu0 0.0
    %238 = vmatpush.msra.mxu0 0.0
    %239 = vmatpush.msra.mxu0 0.0
    %240 = vmatpush.msra.mxu0 0.0
    %v241 = vand.u32 %v135, 4294901760
    %v242 = vsub.f32 %v135, %v241
    %243 = vmatpush.msra.mxu0 %v242
    %v244 = vand.u32 %v134, 4294901760
    %v245 = vsub.f32 %v134, %v244
    %246 = vmatpush.msra.mxu0 %v245
    %v247 = vand.u32 %v133, 4294901760
    %v248 = vsub.f32 %v133, %v247
    %249 = vmatpush.msra.mxu0 %v248
    %v250 = vand.u32 %v132, 4294901760
    %v251 = vsub.f32 %v132, %v250
    %252 = vmatpush.msra.mxu0 %v251
    %v253 = vand.u32 %v131, 4294901760
    %v254 = vsub.f32 %v131, %v253
    %255 = vmatpush.msra.mxu0 %v254
    %v256 = vand.u32 %v130, 4294901760
    %v257 = vsub.f32 %v130, %v256
    %258 = vmatpush.msra.mxu0 %v257
    %v259 = vand.u32 %v129, 4294901760
    %v260 = vsub.f32 %v129, %v259
    %261 = vmatpush.msra.mxu0 %v260
    %v262 = vand.u32 %v128, 4294901760
    %v263 = vsub.f32 %v128, %v262
    %264 = vmatpush.msra.mxu0 %v263
    %v265 = vand.u32 %v137, 4294901760
    %v266 = vsub.f32 %v137, %v265
    %267 = vmatmul.f32.gmra.mxu0 %v266
    %v268 = vpop.f32.mrf.mxu0
    %v269 = vadd.f32 %v231, %v268
    %270 = vdwg.mxu0
    %271 = vmatpush.msra.mxu0 0.0
    %272 = vmatpush.msra.mxu0 0.0
    %273 = vmatpush.msra.mxu0 0.0
    %274 = vmatpush.msra.mxu0 0.0
    %275 = vmatpush.msra.mxu0 0.0
    %276 = vmatpush.msra.mxu0 0.0
    %277 = vmatpush.msra.mxu0 0.0
    %278 = vmatpush.msra.mxu0 0.0
    %v279 = vand.u32 %v135, 4294901760
    %280 = vmatpush.msra.mxu0 %v279
    %v281 = vand.u32 %v134, 4294901760
    %282 = vmatpush.msra.mxu0 %v281
    %v283 = vand.u32 %v133, 4294901760
    %284 = vmatpush.msra.mxu0 %v283
    %v285 = vand.u32 %v132, 4294901760
    %286 = vmatpush.msra.mxu0 %v285
    %v287 = vand.u32 %v131, 4294901760
    %288 = vmatpush.msra.mxu0 %v287
    %v289 = vand.u32 %v130, 4294901760
    %290 = vmatpush.msra.mxu0 %v289
    %v291 = vand.u32 %v129, 4294901760
    %292 = vmatpush.msra.mxu0 %v291
    %v293 = vand.u32 %v128, 4294901760
    %294 = vmatpush.msra.mxu0 %v293
    %v295 = vand.u32 %v137, 4294901760
    %v296 = vsub.f32 %v137, %v295
    %v297 = vand.u32 %v296, 4294901760
    %298 = vmatmul.f32.gmra.mxu0 %v297
    %v299 = vpop.f32.mrf.mxu0
    %v300 = vadd.f32 %v269, %v299
    %301 = vdwg.mxu0
    %302 = vmatpush.msra.mxu0 0.0
    %303 = vmatpush.msra.mxu0 0.0
    %304 = vmatpush.msra.mxu0 0.0
    %305 = vmatpush.msra.mxu0 0.0
    %306 = vmatpush.msra.mxu0 0.0
    %307 = vmatpush.msra.mxu0 0.0
    %308 = vmatpush.msra.mxu0 0.0
    %309 = vmatpush.msra.mxu0 0.0
    %v310 = vand.u32 %v135, 4294901760
    %v311 = vsub.f32 %v135, %v310
    %v312 = vand.u32 %v311, 4294901760
    %313 = vmatpush.msra.mxu0 %v312
    %v314 = vand.u32 %v134, 4294901760
    %v315 = vsub.f32 %v134, %v314
    %v316 = vand.u32 %v315, 4294901760
    %317 = vmatpush.msra.mxu0 %v316
    %v318 = vand.u32 %v133, 4294901760
    %v319 = vsub.f32 %v133, %v318
    %v320 = vand.u32 %v319, 4294901760
    %321 = vmatpush.msra.mxu0 %v320
    %v322 = vand.u32 %v132, 4294901760
    %v323 = vsub.f32 %v132, %v322
    %v324 = vand.u32 %v323, 4294901760
    %325 = vmatpush.msra.mxu0 %v324
    %v326 = vand.u32 %v131, 4294901760
    %v327 = vsub.f32 %v131, %v326
    %v328 = vand.u32 %v327, 4294901760
    %329 = vmatpush.msra.mxu0 %v328
    %v330 = vand.u32 %v130, 4294901760
    %v331 = vsub.f32 %v130, %v330
    %v332 = vand.u32 %v331, 4294901760
    %333 = vmatpush.msra.mxu0 %v332
    %v334 = vand.u32 %v129, 4294901760
    %v335 = vsub.f32 %v129, %v334
    %v336 = vand.u32 %v335, 4294901760
    %337 = vmatpush.msra.mxu0 %v336
    %v338 = vand.u32 %v128, 4294901760
    %v339 = vsub.f32 %v128, %v338
    %v340 = vand.u32 %v339, 4294901760
    %341 = vmatpush.msra.mxu0 %v340
    %v342 = vand.u32 %v137, 4294901760
    %343 = vmatmul.f32.gmra.mxu0 %v342
    %v344 = vpop.f32.mrf.mxu0
    %v345 = vadd.f32 %v300, %v344
    %346 = vdwg.mxu0
    %347 = vmatpush.msra.mxu0 0.0
    %348 = vmatpush.msra.mxu0 0.0
    %349 = vmatpush.msra.mxu0 0.0
    %350 = vmatpush.msra.mxu0 0.0
    %351 = vmatpush.msra.mxu0 0.0
    %352 = vmatpush.msra.mxu0 0.0
    %353 = vmatpush.msra.mxu0 0.0
    %354 = vmatpush.msra.mxu0 0.0
    %v355 = vand.u32 %v135, 4294901760
    %356 = vmatpush.msra.mxu0 %v355
    %v357 = vand.u32 %v134, 4294901760
    %358 = vmatpush.msra.mxu0 %v357
    %v359 = vand.u32 %v133, 4294901760
    %360 = vmatpush.msra.mxu0 %v359
    %v361 = vand.u32 %v132, 4294901760
    %362 = vmatpush.msra.mxu0 %v361
    %v363 = vand.u32 %v131, 4294901760
    %364 = vmatpush.msra.mxu0 %v363
    %v365 = vand.u32 %v130, 4294901760
    %366 = vmatpush.msra.mxu0 %v365
    %v367 = vand.u32 %v129, 4294901760
    %368 = vmatpush.msra.mxu0 %v367
    %v369 = vand.u32 %v128, 4294901760
    %370 = vmatpush.msra.mxu0 %v369
    %v371 = vand.u32 %v137, 4294901760
    %372 = vmatmul.f32.gmra.mxu0 %v371
    %v373 = vpop.f32.mrf.mxu0
    %v374 = vadd.f32 %v345, %v373
    %375 = vdwg.mxu0
    %v377 = vsel %vm97, %v127, 0
    %379 = vmatpush.msra.mxu0 0.0
    %380 = vmatpush.msra.mxu0 0.0
    %381 = vmatpush.msra.mxu0 0.0
    %382 = vmatpush.msra.mxu0 0.0
    %383 = vmatpush.msra.mxu0 0.0
    %384 = vmatpush.msra.mxu0 0.0
    %385 = vmatpush.msra.mxu0 0.0
    %386 = vmatpush.msra.mxu0 0.0
    %v387 = vand.u32 %v135, 4294901760
    %388 = vmatpush.msra.mxu0 %v387
    %v389 = vand.u32 %v134, 4294901760
    %390 = vmatpush.msra.mxu0 %v389
    %v391 = vand.u32 %v133, 4294901760
    %392 = vmatpush.msra.mxu0 %v391
    %v393 = vand.u32 %v132, 4294901760
    %394 = vmatpush.msra.mxu0 %v393
    %v395 = vand.u32 %v131, 4294901760
    %396 = vmatpush.msra.mxu0 %v395
    %v397 = vand.u32 %v130, 4294901760
    %398 = vmatpush.msra.mxu0 %v397
    %v399 = vand.u32 %v129, 4294901760
    %400 = vmatpush.msra.mxu0 %v399
    %v401 = vand.u32 %v128, 4294901760
    %402 = vmatpush.msra.mxu0 %v401
    %v403 = vand.u32 %v377, 4294901760
    %v404 = vsub.f32 %v377, %v403
    %v405 = vand.u32 %v404, 4294901760
    %v406 = vsub.f32 %v404, %v405
    %v407 = vand.u32 %v406, 4294901760
    %408 = vmatmul.f32.gmra.mxu0 %v407
    %v409 = vpop.f32.mrf.mxu0
    %v410 = vadd.f32 0.0, %v409
    %411 = vdwg.mxu0
    %412 = vmatpush.msra.mxu0 0.0
    %413 = vmatpush.msra.mxu0 0.0
    %414 = vmatpush.msra.mxu0 0.0
    %415 = vmatpush.msra.mxu0 0.0
    %416 = vmatpush.msra.mxu0 0.0
    %417 = vmatpush.msra.mxu0 0.0
    %418 = vmatpush.msra.mxu0 0.0
    %419 = vmatpush.msra.mxu0 0.0
    %v420 = vand.u32 %v135, 4294901760
    %v421 = vsub.f32 %v135, %v420
    %v422 = vand.u32 %v421, 4294901760
    %v423 = vsub.f32 %v421, %v422
    %v424 = vand.u32 %v423, 4294901760
    %425 = vmatpush.msra.mxu0 %v424
    %v426 = vand.u32 %v134, 4294901760
    %v427 = vsub.f32 %v134, %v426
    %v428 = vand.u32 %v427, 4294901760
    %v429 = vsub.f32 %v427, %v428
    %v430 = vand.u32 %v429, 4294901760
    %431 = vmatpush.msra.mxu0 %v430
    %v432 = vand.u32 %v133, 4294901760
    %v433 = vsub.f32 %v133, %v432
    %v434 = vand.u32 %v433, 4294901760
    %v435 = vsub.f32 %v433, %v434
    %v436 = vand.u32 %v435, 4294901760
    %437 = vmatpush.msra.mxu0 %v436
    %v438 = vand.u32 %v132, 4294901760
    %v439 = vsub.f32 %v132, %v438
    %v440 = vand.u32 %v439, 4294901760
    %v441 = vsub.f32 %v439, %v440
    %v442 = vand.u32 %v441, 4294901760
    %443 = vmatpush.msra.mxu0 %v442
    %v444 = vand.u32 %v131, 4294901760
    %v445 = vsub.f32 %v131, %v444
    %v446 = vand.u32 %v445, 4294901760
    %v447 = vsub.f32 %v445, %v446
    %v448 = vand.u32 %v447, 4294901760
    %449 = vmatpush.msra.mxu0 %v448
    %v450 = vand.u32 %v130, 4294901760
    %v451 = vsub.f32 %v130, %v450
    %v452 = vand.u32 %v451, 4294901760
    %v453 = vsub.f32 %v451, %v452
    %v454 = vand.u32 %v453, 4294901760
    %455 = vmatpush.msra.mxu0 %v454
    %v456 = vand.u32 %v129, 4294901760
    %v457 = vsub.f32 %v129, %v456
    %v458 = vand.u32 %v457, 4294901760
    %v459 = vsub.f32 %v457, %v458
    %v460 = vand.u32 %v459, 4294901760
    %461 = vmatpush.msra.mxu0 %v460
    %v462 = vand.u32 %v128, 4294901760
    %v463 = vsub.f32 %v128, %v462
    %v464 = vand.u32 %v463, 4294901760
    %v465 = vsub.f32 %v463, %v464
    %v466 = vand.u32 %v465, 4294901760
    %467 = vmatpush.msra.mxu0 %v466
    %v468 = vand.u32 %v377, 4294901760
    %469 = vmatmul.f32.gmra.mxu0 %v468
    %v470 = vpop.f32.mrf.mxu0
    %v471 = vadd.f32 %v410, %v470
    %472 = vdwg.mxu0
    %473 = vmatpush.msra.mxu0 0.0
    %474 = vmatpush.msra.mxu0 0.0
    %475 = vmatpush.msra.mxu0 0.0
    %476 = vmatpush.msra.mxu0 0.0
    %477 = vmatpush.msra.mxu0 0.0
    %478 = vmatpush.msra.mxu0 0.0
    %479 = vmatpush.msra.mxu0 0.0
    %480 = vmatpush.msra.mxu0 0.0
    %v481 = vand.u32 %v135, 4294901760
    %v482 = vsub.f32 %v135, %v481
    %483 = vmatpush.msra.mxu0 %v482
    %v484 = vand.u32 %v134, 4294901760
    %v485 = vsub.f32 %v134, %v484
    %486 = vmatpush.msra.mxu0 %v485
    %v487 = vand.u32 %v133, 4294901760
    %v488 = vsub.f32 %v133, %v487
    %489 = vmatpush.msra.mxu0 %v488
    %v490 = vand.u32 %v132, 4294901760
    %v491 = vsub.f32 %v132, %v490
    %492 = vmatpush.msra.mxu0 %v491
    %v493 = vand.u32 %v131, 4294901760
    %v494 = vsub.f32 %v131, %v493
    %495 = vmatpush.msra.mxu0 %v494
    %v496 = vand.u32 %v130, 4294901760
    %v497 = vsub.f32 %v130, %v496
    %498 = vmatpush.msra.mxu0 %v497
    %v499 = vand.u32 %v129, 4294901760
    %v500 = vsub.f32 %v129, %v499
    %501 = vmatpush.msra.mxu0 %v500
    %v502 = vand.u32 %v128, 4294901760
    %v503 = vsub.f32 %v128, %v502
    %504 = vmatpush.msra.mxu0 %v503
    %v505 = vand.u32 %v377, 4294901760
    %v506 = vsub.f32 %v377, %v505
    %507 = vmatmul.f32.gmra.mxu0 %v506
    %v508 = vpop.f32.mrf.mxu0
    %v509 = vadd.f32 %v471, %v508
    %510 = vdwg.mxu0
    %511 = vmatpush.msra.mxu0 0.0
    %512 = vmatpush.msra.mxu0 0.0
    %513 = vmatpush.msra.mxu0 0.0
    %514 = vmatpush.msra.mxu0 0.0
    %515 = vmatpush.msra.mxu0 0.0
    %516 = vmatpush.msra.mxu0 0.0
    %517 = vmatpush.msra.mxu0 0.0
    %518 = vmatpush.msra.mxu0 0.0
    %v519 = vand.u32 %v135, 4294901760
    %520 = vmatpush.msra.mxu0 %v519
    %v521 = vand.u32 %v134, 4294901760
    %522 = vmatpush.msra.mxu0 %v521
    %v523 = vand.u32 %v133, 4294901760
    %524 = vmatpush.msra.mxu0 %v523
    %v525 = vand.u32 %v132, 4294901760
    %526 = vmatpush.msra.mxu0 %v525
    %v527 = vand.u32 %v131, 4294901760
    %528 = vmatpush.msra.mxu0 %v527
    %v529 = vand.u32 %v130, 4294901760
    %530 = vmatpush.msra.mxu0 %v529
    %v531 = vand.u32 %v129, 4294901760
    %532 = vmatpush.msra.mxu0 %v531
    %v533 = vand.u32 %v128, 4294901760
    %534 = vmatpush.msra.mxu0 %v533
    %v535 = vand.u32 %v377, 4294901760
    %v536 = vsub.f32 %v377, %v535
    %v537 = vand.u32 %v536, 4294901760
    %538 = vmatmul.f32.gmra.mxu0 %v537
    %v539 = vpop.f32.mrf.mxu0
    %v540 = vadd.f32 %v509, %v539
    %541 = vdwg.mxu0
    %542 = vmatpush.msra.mxu0 0.0
    %543 = vmatpush.msra.mxu0 0.0
    %544 = vmatpush.msra.mxu0 0.0
    %545 = vmatpush.msra.mxu0 0.0
    %546 = vmatpush.msra.mxu0 0.0
    %547 = vmatpush.msra.mxu0 0.0
    %548 = vmatpush.msra.mxu0 0.0
    %549 = vmatpush.msra.mxu0 0.0
    %v550 = vand.u32 %v135, 4294901760
    %v551 = vsub.f32 %v135, %v550
    %v552 = vand.u32 %v551, 4294901760
    %553 = vmatpush.msra.mxu0 %v552
    %v554 = vand.u32 %v134, 4294901760
    %v555 = vsub.f32 %v134, %v554
    %v556 = vand.u32 %v555, 4294901760
    %557 = vmatpush.msra.mxu0 %v556
    %v558 = vand.u32 %v133, 4294901760
    %v559 = vsub.f32 %v133, %v558
    %v560 = vand.u32 %v559, 4294901760
    %561 = vmatpush.msra.mxu0 %v560
    %v562 = vand.u32 %v132, 4294901760
    %v563 = vsub.f32 %v132, %v562
    %v564 = vand.u32 %v563, 4294901760
    %565 = vmatpush.msra.mxu0 %v564
    %v566 = vand.u32 %v131, 4294901760
    %v567 = vsub.f32 %v131, %v566
    %v568 = vand.u32 %v567, 4294901760
    %569 = vmatpush.msra.mxu0 %v568
    %v570 = vand.u32 %v130, 4294901760
    %v571 = vsub.f32 %v130, %v570
    %v572 = vand.u32 %v571, 4294901760
    %573 = vmatpush.msra.mxu0 %v572
    %v574 = vand.u32 %v129, 4294901760
    %v575 = vsub.f32 %v129, %v574
    %v576 = vand.u32 %v575, 4294901760
    %577 = vmatpush.msra.mxu0 %v576
    %v578 = vand.u32 %v128, 4294901760
    %v579 = vsub.f32 %v128, %v578
    %v580 = vand.u32 %v579, 4294901760
    %581 = vmatpush.msra.mxu0 %v580
    %v582 = vand.u32 %v377, 4294901760
    %583 = vmatmul.f32.gmra.mxu0 %v582
    %v584 = vpop.f32.mrf.mxu0
    %v585 = vadd.f32 %v540, %v584
    %586 = vdwg.mxu0
    %587 = vmatpush.msra.mxu0 0.0
    %588 = vmatpush.msra.mxu0 0.0
    %589 = vmatpush.msra.mxu0 0.0
    %590 = vmatpush.msra.mxu0 0.0
    %591 = vmatpush.msra.mxu0 0.0
    %592 = vmatpush.msra.mxu0 0.0
    %593 = vmatpush.msra.mxu0 0.0
    %594 = vmatpush.msra.mxu0 0.0
    %v595 = vand.u32 %v135, 4294901760
    %596 = vmatpush.msra.mxu0 %v595
    %v597 = vand.u32 %v134, 4294901760
    %598 = vmatpush.msra.mxu0 %v597
    %v599 = vand.u32 %v133, 4294901760
    %600 = vmatpush.msra.mxu0 %v599
    %v601 = vand.u32 %v132, 4294901760
    %602 = vmatpush.msra.mxu0 %v601
    %v603 = vand.u32 %v131, 4294901760
    %604 = vmatpush.msra.mxu0 %v603
    %v605 = vand.u32 %v130, 4294901760
    %606 = vmatpush.msra.mxu0 %v605
    %v607 = vand.u32 %v129, 4294901760
    %608 = vmatpush.msra.mxu0 %v607
    %v609 = vand.u32 %v128, 4294901760
    %610 = vmatpush.msra.mxu0 %v609
    %v611 = vand.u32 %v377, 4294901760
    %612 = vmatmul.f32.gmra.mxu0 %v611
    %v613 = vpop.f32.mrf.mxu0
    %v614 = vadd.f32 %v585, %v613
    %615 = vdwg.mxu0
    %v616 = vmul.f32 %v374, 0.001953125
    %v617 = vmul.f32 %v614, 0.001953125
    %v618 = vmul.f32 %v616, %v616
    %v619 = vsub.f32 %v617, %v618
    %v620 = vmax.f32 %v619, 0.0
    %v621 = vadd.f32 %v620, 1e-05
    %v622 = vrsqrt.pop %v621
    %v623 = vmul.f32 %v622, %v621
    %v624 = vmul.f32 %v623, %v622
    %v625 = vmul.f32 0.5, %v624
    %v626 = vsub.f32 1.5, %v625
    %v627 = vmul.f32 %v622, %v626
    %vm628 = vweird.f32 %v621
    %vm629 = vweird.f32 %v622
    %vm630 = vmor %vm628, %vm629
    %v631 = vsel %vm630, %v622, %v627
    %v632 = vld [vmem:[%s3] sm:$0x1]
    %v633 = vmul.f32 %v631, %v632
    %v634 = vperm.slane %v616, 0
    %v635 = vsub.f32 %v93, %v634
    %v636 = vsub.f32 %v94, %v634
    %v637 = vsub.f32 %v95, %v634
    %v638 = vsub.f32 %v96, %v634
    %v639 = vperm.slane %v633, 0
    %v640 = vmul.f32 %v635, %v639
    %v641 = vmul.f32 %v636, %v639
    %v642 = vmul.f32 %v637, %v639
    %v643 = vmul.f32 %v638, %v639
    %v644 = vld [vmem:[%s4] sm:$0x1]
    %v646 = vperm.slane %v644, 0
    %v648 = vadd.f32 %v640, %v646
    %v649 = vadd.f32 %v641, %v646
    %v650 = vadd.f32 %v642, %v646
    %v651 = vadd.f32 %v643, %v646
    %s652 = scalar_lea.vmem [#allocation6], 64
    %v653 = vld [vmem:[%s652] sm:$0xff]
    %v654 = vld [vmem:[%s652 + $0x8] sm:$0xff]
    %v655 = vld [vmem:[%s652 + $0x10] sm:$0xff]
    %v656 = vld [vmem:[%s652 + $0x18] sm:$0xff]
    %v657 = vld [vmem:[%s652 + $0x20] sm:$0xff]
    %v658 = vld [vmem:[%s652 + $0x28] sm:$0xff]
    %v659 = vld [vmem:[%s652 + $0x30] sm:$0xff]
    %v660 = vld [vmem:[%s652 + $0x38] sm:$0xff]
    %vm661 = vcmask 261120
    %v663 = vsel %vm661, %v85, 0
    %v666 = vsel %vm661, %v86, 0
    %v669 = vsel %vm661, %v87, 0
    %v672 = vsel %vm661, %v88, 0
    %674 = vmatpush.msra.mxu0 0.0
    %675 = vmatpush.msra.mxu0 0.0
    %676 = vmatpush.msra.mxu0 0.0
    %677 = vmatpush.msra.mxu0 0.0
    %678 = vmatpush.msra.mxu0 0.0
    %679 = vmatpush.msra.mxu0 0.0
    %680 = vmatpush.msra.mxu0 0.0
    %681 = vmatpush.msra.mxu0 0.0
    %682 = vmatpush.msra.mxu0 0.0
    %683 = vmatpush.msra.mxu0 0.0
    %684 = vmatpush.msra.mxu0 0.0
    %685 = vmatpush.msra.mxu0 0.0
    %686 = vmatpush.msra.mxu0 %v651
    %687 = vmatpush.msra.mxu0 %v650
    %688 = vmatpush.msra.mxu0 %v649
    %689 = vmatpush.msra.mxu0 %v648
    %690 = vmatmul.f32.gmra.mxu0 %v663
    %v691 = vpop.f32.mrf.mxu0
    %v692 = vadd.f32 0.0, %v691
    %693 = vmatmul.f32.gmra.mxu0 %v666
    %v694 = vpop.f32.mrf.mxu0
    %v695 = vadd.f32 0.0, %v694
    %696 = vmatmul.f32.gmra.mxu0 %v669
    %v697 = vpop.f32.mrf.mxu0
    %v698 = vadd.f32 0.0, %v697
    %699 = vmatmul.f32.gmra.mxu0 %v672
    %v700 = vpop.f32.mrf.mxu0
    %v701 = vadd.f32 0.0, %v700
    %702 = vdwg.mxu0
    %v703 = vld [vmem:[#allocation6] sm:$0xff]
    %v704 = vld [vmem:[#allocation6 + $0x8] sm:$0xff]
    %v705 = vld [vmem:[#allocation6 + $0x10] sm:$0xff]
    %v706 = vld [vmem:[#allocation6 + $0x18] sm:$0xff]
    %v707 = vld [vmem:[#allocation6 + $0x20] sm:$0xff]
    %v708 = vld [vmem:[#allocation6 + $0x28] sm:$0xff]
    %v709 = vld [vmem:[#allocation6 + $0x30] sm:$0xff]
    %v710 = vld [vmem:[#allocation6 + $0x38] sm:$0xff]
    %v712 = vsel %vm97, %v692, 0
    %v715 = vsel %vm97, %v695, 0
    %v718 = vsel %vm97, %v698, 0
    %v721 = vsel %vm97, %v701, 0
    %723 = vmatpush.msra.mxu0 0.0
    %724 = vmatpush.msra.mxu0 0.0
    %725 = vmatpush.msra.mxu0 0.0
    %726 = vmatpush.msra.mxu0 0.0
    %727 = vmatpush.msra.mxu0 0.0
    %728 = vmatpush.msra.mxu0 0.0
    %729 = vmatpush.msra.mxu0 0.0
    %730 = vmatpush.msra.mxu0 0.0
    %731 = vmatpush.msra.mxu0 %v710
    %732 = vmatpush.msra.mxu0 %v709
    %733 = vmatpush.msra.mxu0 %v708
    %734 = vmatpush.msra.mxu0 %v707
    %735 = vmatpush.msra.mxu0 %v706
    %736 = vmatpush.msra.mxu0 %v705
    %737 = vmatpush.msra.mxu0 %v704
    %738 = vmatpush.msra.mxu0 %v703
    %739 = vmatmul.f32.gmra.mxu0 %v712
    %v740 = vpop.f32.mrf.mxu0
    %v741 = vadd.f32 0.0, %v740
    %742 = vmatmul.f32.gmra.mxu0 %v715
    %v743 = vpop.f32.mrf.mxu0
    %v744 = vadd.f32 0.0, %v743
    %745 = vmatmul.f32.gmra.mxu0 %v718
    %v746 = vpop.f32.mrf.mxu0
    %v747 = vadd.f32 0.0, %v746
    %748 = vmatmul.f32.gmra.mxu0 %v721
    %v749 = vpop.f32.mrf.mxu0
    %v750 = vadd.f32 0.0, %v749
    %751 = vdwg.mxu0
    %v753 = vsel %vm97, %v648, 0
    %v756 = vsel %vm97, %v649, 0
    %v759 = vsel %vm97, %v650, 0
    %v762 = vsel %vm97, %v651, 0
    %764 = vmatpush.msra.mxu0 0.0
    %765 = vmatpush.msra.mxu0 0.0
    %766 = vmatpush.msra.mxu0 0.0
    %767 = vmatpush.msra.mxu0 0.0
    %768 = vmatpush.msra.mxu0 0.0
    %769 = vmatpush.msra.mxu0 0.0
    %770 = vmatpush.msra.mxu0 0.0
    %771 = vmatpush.msra.mxu0 0.0
    %772 = vmatpush.msra.mxu0 %v660
    %773 = vmatpush.msra.mxu0 %v659
    %774 = vmatpush.msra.mxu0 %v658
    %775 = vmatpush.msra.mxu0 %v657
    %776 = vmatpush.msra.mxu0 %v656
    %777 = vmatpush.msra.mxu0 %v655
    %778 = vmatpush.msra.mxu0 %v654
    %779 = vmatpush.msra.mxu0 %v653
    %780 = vmatmul.f32.gmra.mxu0 %v753
    %v781 = vpop.f32.mrf.mxu0
    %v782 = vadd.f32 %v741, %v781
    %783 = vmatmul.f32.gmra.mxu0 %v756
    %v784 = vpop.f32.mrf.mxu0
    %v785 = vadd.f32 %v744, %v784
    %786 = vmatmul.f32.gmra.mxu0 %v759
    %v787 = vpop.f32.mrf.mxu0
    %v788 = vadd.f32 %v747, %v787
    %789 = vmatmul.f32.gmra.mxu0 %v762
    %v790 = vpop.f32.mrf.mxu0
    %v791 = vadd.f32 %v750, %v790
    %792 = vdwg.mxu0
    %v794 = vsel %vm661, %v89, 0
    %v797 = vsel %vm661, %v90, 0
    %v800 = vsel %vm661, %v91, 0
    %v803 = vsel %vm661, %v92, 0
    %805 = vmatpush.msra.mxu0 0.0
    %806 = vmatpush.msra.mxu0 0.0
    %807 = vmatpush.msra.mxu0 0.0
    %808 = vmatpush.msra.mxu0 0.0
    %809 = vmatpush.msra.mxu0 0.0
    %810 = vmatpush.msra.mxu0 0.0
    %811 = vmatpush.msra.mxu0 0.0
    %812 = vmatpush.msra.mxu0 0.0
    %813 = vmatpush.msra.mxu0 0.0
    %814 = vmatpush.msra.mxu0 0.0
    %815 = vmatpush.msra.mxu0 0.0
    %816 = vmatpush.msra.mxu0 0.0
    %817 = vmatpush.msra.mxu0 %v651
    %818 = vmatpush.msra.mxu0 %v650
    %819 = vmatpush.msra.mxu0 %v649
    %820 = vmatpush.msra.mxu0 %v648
    %821 = vmatmul.f32.gmra.mxu0 %v794
    %v822 = vpop.f32.mrf.mxu0
    %v823 = vadd.f32 0.0, %v822
    %824 = vmatmul.f32.gmra.mxu0 %v797
    %v825 = vpop.f32.mrf.mxu0
    %v826 = vadd.f32 0.0, %v825
    %827 = vmatmul.f32.gmra.mxu0 %v800
    %v828 = vpop.f32.mrf.mxu0
    %v829 = vadd.f32 0.0, %v828
    %830 = vmatmul.f32.gmra.mxu0 %v803
    %v831 = vpop.f32.mrf.mxu0
    %v832 = vadd.f32 0.0, %v831
    %833 = vdwg.mxu0
    %s834 = scalar_lea.vmem [#allocation6], 128
    %v835 = vld [vmem:[%s834] sm:$0xff]
    %v836 = vld [vmem:[%s834 + $0x8] sm:$0xff]
    %v837 = vld [vmem:[%s834 + $0x10] sm:$0xff]
    %v838 = vld [vmem:[%s834 + $0x18] sm:$0xff]
    %v839 = vld [vmem:[%s834 + $0x20] sm:$0xff]
    %v840 = vld [vmem:[%s834 + $0x28] sm:$0xff]
    %v841 = vld [vmem:[%s834 + $0x30] sm:$0xff]
    %v842 = vld [vmem:[%s834 + $0x38] sm:$0xff]
    %v844 = vsel %vm97, %v823, 0
    %v847 = vsel %vm97, %v826, 0
    %v850 = vsel %vm97, %v829, 0
    %v853 = vsel %vm97, %v832, 0
    %855 = vmatpush.msra.mxu0 0.0
    %856 = vmatpush.msra.mxu0 0.0
    %857 = vmatpush.msra.mxu0 0.0
    %858 = vmatpush.msra.mxu0 0.0
    %859 = vmatpush.msra.mxu0 0.0
    %860 = vmatpush.msra.mxu0 0.0
    %861 = vmatpush.msra.mxu0 0.0
    %862 = vmatpush.msra.mxu0 0.0
    %863 = vmatpush.msra.mxu0 %v842
    %864 = vmatpush.msra.mxu0 %v841
    %865 = vmatpush.msra.mxu0 %v840
    %866 = vmatpush.msra.mxu0 %v839
    %867 = vmatpush.msra.mxu0 %v838
    %868 = vmatpush.msra.mxu0 %v837
    %869 = vmatpush.msra.mxu0 %v836
    %870 = vmatpush.msra.mxu0 %v835
    %871 = vmatmul.f32.gmra.mxu0 %v844
    %v872 = vpop.f32.mrf.mxu0
    %v873 = vadd.f32 0.0, %v872
    %874 = vmatmul.f32.gmra.mxu0 %v847
    %v875 = vpop.f32.mrf.mxu0
    %v876 = vadd.f32 0.0, %v875
    %877 = vmatmul.f32.gmra.mxu0 %v850
    %v878 = vpop.f32.mrf.mxu0
    %v879 = vadd.f32 0.0, %v878
    %880 = vmatmul.f32.gmra.mxu0 %v853
    %v881 = vpop.f32.mrf.mxu0
    %v882 = vadd.f32 0.0, %v881
    %883 = vdwg.mxu0
    %v884 = vadd.f32 %v782, %v873
    %v885 = vadd.f32 %v785, %v876
    %v886 = vadd.f32 %v788, %v879
    %v887 = vadd.f32 %v791, %v882
    %v888 = vmax.f32 %v884, 0.0
    %v889 = vmax.f32 %v885, 0.0
    %v890 = vmax.f32 %v886, 0.0
    %v891 = vmax.f32 %v887, 0.0
    %v892 = vadd.f32 %v888, %v889
    %v893 = vadd.f32 %v892, %v890
    %v894 = vadd.f32 %v893, %v891
    %v895 = vrot.slane %v894, 4
    %v896 = vadd.f32 %v894, %v895
    %v897 = vrot.slane %v896, 2
    %v898 = vadd.f32 %v896, %v897
    %v899 = vrot.slane %v898, 1
    %v900 = vadd.f32 %v898, %v899
    %v901 = vmul.f32 %v888, %v888
    %v902 = vmul.f32 %v889, %v889
    %v903 = vmul.f32 %v890, %v890
    %v904 = vmul.f32 %v891, %v891
    %v905 = vadd.f32 %v901, %v902
    %v906 = vadd.f32 %v905, %v903
    %v907 = vadd.f32 %v906, %v904
    %v908 = vrot.slane %v907, 4
    %v909 = vadd.f32 %v907, %v908
    %v910 = vrot.slane %v909, 2
    %v911 = vadd.f32 %v909, %v910
    %v912 = vrot.slane %v911, 1
    %v913 = vadd.f32 %v911, %v912
    %v914 = vld [vmem:[%s9] sm:$0xff]
    %v915 = vld [vmem:[%s9 + $0x8] sm:$0xff]
    %v916 = vld [vmem:[%s9 + $0x10] sm:$0xff]
    %v917 = vld [vmem:[%s9 + $0x18] sm:$0xff]
    %v918 = vld [vmem:[%s9 + $0x20] sm:$0xff]
    %v919 = vld [vmem:[%s9 + $0x28] sm:$0xff]
    %v920 = vld [vmem:[%s9 + $0x30] sm:$0xff]
    %v921 = vld [vmem:[%s9 + $0x38] sm:$0xff]
    %v922 = vld [vmem:[%s9 + $0x40] sm:$0xff]
    %v923 = vld [vmem:[%s9 + $0x48] sm:$0xff]
    %v924 = vld [vmem:[%s9 + $0x50] sm:$0xff]
    %v925 = vld [vmem:[%s9 + $0x58] sm:$0xff]
    %v926 = vld [vmem:[%s9 + $0x60] sm:$0xff]
    %v927 = vld [vmem:[%s9 + $0x68] sm:$0xff]
    %v928 = vld [vmem:[%s9 + $0x70] sm:$0xff]
    %v929 = vld [vmem:[%s9 + $0x78] sm:$0xff]
    %v930 = vand.u32 %v929, 4294901760
    %931 = vmatpush.msra.mxu0 %v930
    %v932 = vand.u32 %v928, 4294901760
    %933 = vmatpush.msra.mxu0 %v932
    %v934 = vand.u32 %v927, 4294901760
    %935 = vmatpush.msra.mxu0 %v934
    %v936 = vand.u32 %v926, 4294901760
    %937 = vmatpush.msra.mxu0 %v936
    %v938 = vand.u32 %v925, 4294901760
    %939 = vmatpush.msra.mxu0 %v938
    %v940 = vand.u32 %v924, 4294901760
    %941 = vmatpush.msra.mxu0 %v940
    %v942 = vand.u32 %v923, 4294901760
    %943 = vmatpush.msra.mxu0 %v942
    %v944 = vand.u32 %v922, 4294901760
    %945 = vmatpush.msra.mxu0 %v944
    %v946 = vand.u32 %v921, 4294901760
    %947 = vmatpush.msra.mxu0 %v946
    %v948 = vand.u32 %v920, 4294901760
    %949 = vmatpush.msra.mxu0 %v948
    %v950 = vand.u32 %v919, 4294901760
    %951 = vmatpush.msra.mxu0 %v950
    %v952 = vand.u32 %v918, 4294901760
    %953 = vmatpush.msra.mxu0 %v952
    %v954 = vand.u32 %v917, 4294901760
    %955 = vmatpush.msra.mxu0 %v954
    %v956 = vand.u32 %v916, 4294901760
    %957 = vmatpush.msra.mxu0 %v956
    %v958 = vand.u32 %v915, 4294901760
    %959 = vmatpush.msra.mxu0 %v958
    %v960 = vand.u32 %v914, 4294901760
    %961 = vmatpush.msra.mxu0 %v960
    %v962 = vand.u32 %v900, 4294901760
    %v963 = vsub.f32 %v900, %v962
    %v964 = vand.u32 %v963, 4294901760
    %v965 = vsub.f32 %v963, %v964
    %v966 = vand.u32 %v965, 4294901760
    %967 = vmatmul.f32.gmra.mxu0 %v966
    %v968 = vpop.f32.mrf.mxu0
    %v969 = vadd.f32 0.0, %v968
    %970 = vdwg.mxu0
    %v971 = vand.u32 %v929, 4294901760
    %v972 = vsub.f32 %v929, %v971
    %v973 = vand.u32 %v972, 4294901760
    %v974 = vsub.f32 %v972, %v973
    %v975 = vand.u32 %v974, 4294901760
    %976 = vmatpush.msra.mxu0 %v975
    %v977 = vand.u32 %v928, 4294901760
    %v978 = vsub.f32 %v928, %v977
    %v979 = vand.u32 %v978, 4294901760
    %v980 = vsub.f32 %v978, %v979
    %v981 = vand.u32 %v980, 4294901760
    %982 = vmatpush.msra.mxu0 %v981
    %v983 = vand.u32 %v927, 4294901760
    %v984 = vsub.f32 %v927, %v983
    %v985 = vand.u32 %v984, 4294901760
    %v986 = vsub.f32 %v984, %v985
    %v987 = vand.u32 %v986, 4294901760
    %988 = vmatpush.msra.mxu0 %v987
    %v989 = vand.u32 %v926, 4294901760
    %v990 = vsub.f32 %v926, %v989
    %v991 = vand.u32 %v990, 4294901760
    %v992 = vsub.f32 %v990, %v991
    %v993 = vand.u32 %v992, 4294901760
    %994 = vmatpush.msra.mxu0 %v993
    %v995 = vand.u32 %v925, 4294901760
    %v996 = vsub.f32 %v925, %v995
    %v997 = vand.u32 %v996, 4294901760
    %v998 = vsub.f32 %v996, %v997
    %v999 = vand.u32 %v998, 4294901760
    %1000 = vmatpush.msra.mxu0 %v999
    %v1001 = vand.u32 %v924, 4294901760
    %v1002 = vsub.f32 %v924, %v1001
    %v1003 = vand.u32 %v1002, 4294901760
    %v1004 = vsub.f32 %v1002, %v1003
    %v1005 = vand.u32 %v1004, 4294901760
    %1006 = vmatpush.msra.mxu0 %v1005
    %v1007 = vand.u32 %v923, 4294901760
    %v1008 = vsub.f32 %v923, %v1007
    %v1009 = vand.u32 %v1008, 4294901760
    %v1010 = vsub.f32 %v1008, %v1009
    %v1011 = vand.u32 %v1010, 4294901760
    %1012 = vmatpush.msra.mxu0 %v1011
    %v1013 = vand.u32 %v922, 4294901760
    %v1014 = vsub.f32 %v922, %v1013
    %v1015 = vand.u32 %v1014, 4294901760
    %v1016 = vsub.f32 %v1014, %v1015
    %v1017 = vand.u32 %v1016, 4294901760
    %1018 = vmatpush.msra.mxu0 %v1017
    %v1019 = vand.u32 %v921, 4294901760
    %v1020 = vsub.f32 %v921, %v1019
    %v1021 = vand.u32 %v1020, 4294901760
    %v1022 = vsub.f32 %v1020, %v1021
    %v1023 = vand.u32 %v1022, 4294901760
    %1024 = vmatpush.msra.mxu0 %v1023
    %v1025 = vand.u32 %v920, 4294901760
    %v1026 = vsub.f32 %v920, %v1025
    %v1027 = vand.u32 %v1026, 4294901760
    %v1028 = vsub.f32 %v1026, %v1027
    %v1029 = vand.u32 %v1028, 4294901760
    %1030 = vmatpush.msra.mxu0 %v1029
    %v1031 = vand.u32 %v919, 4294901760
    %v1032 = vsub.f32 %v919, %v1031
    %v1033 = vand.u32 %v1032, 4294901760
    %v1034 = vsub.f32 %v1032, %v1033
    %v1035 = vand.u32 %v1034, 4294901760
    %1036 = vmatpush.msra.mxu0 %v1035
    %v1037 = vand.u32 %v918, 4294901760
    %v1038 = vsub.f32 %v918, %v1037
    %v1039 = vand.u32 %v1038, 4294901760
    %v1040 = vsub.f32 %v1038, %v1039
    %v1041 = vand.u32 %v1040, 4294901760
    %1042 = vmatpush.msra.mxu0 %v1041
    %v1043 = vand.u32 %v917, 4294901760
    %v1044 = vsub.f32 %v917, %v1043
    %v1045 = vand.u32 %v1044, 4294901760
    %v1046 = vsub.f32 %v1044, %v1045
    %v1047 = vand.u32 %v1046, 4294901760
    %1048 = vmatpush.msra.mxu0 %v1047
    %v1049 = vand.u32 %v916, 4294901760
    %v1050 = vsub.f32 %v916, %v1049
    %v1051 = vand.u32 %v1050, 4294901760
    %v1052 = vsub.f32 %v1050, %v1051
    %v1053 = vand.u32 %v1052, 4294901760
    %1054 = vmatpush.msra.mxu0 %v1053
    %v1055 = vand.u32 %v915, 4294901760
    %v1056 = vsub.f32 %v915, %v1055
    %v1057 = vand.u32 %v1056, 4294901760
    %v1058 = vsub.f32 %v1056, %v1057
    %v1059 = vand.u32 %v1058, 4294901760
    %1060 = vmatpush.msra.mxu0 %v1059
    %v1061 = vand.u32 %v914, 4294901760
    %v1062 = vsub.f32 %v914, %v1061
    %v1063 = vand.u32 %v1062, 4294901760
    %v1064 = vsub.f32 %v1062, %v1063
    %v1065 = vand.u32 %v1064, 4294901760
    %1066 = vmatpush.msra.mxu0 %v1065
    %v1067 = vand.u32 %v900, 4294901760
    %1068 = vmatmul.f32.gmra.mxu0 %v1067
    %v1069 = vpop.f32.mrf.mxu0
    %v1070 = vadd.f32 %v969, %v1069
    %1071 = vdwg.mxu0
    %v1072 = vand.u32 %v929, 4294901760
    %v1073 = vsub.f32 %v929, %v1072
    %1074 = vmatpush.msra.mxu0 %v1073
    %v1075 = vand.u32 %v928, 4294901760
    %v1076 = vsub.f32 %v928, %v1075
    %1077 = vmatpush.msra.mxu0 %v1076
    %v1078 = vand.u32 %v927, 4294901760
    %v1079 = vsub.f32 %v927, %v1078
    %1080 = vmatpush.msra.mxu0 %v1079
    %v1081 = vand.u32 %v926, 4294901760
    %v1082 = vsub.f32 %v926, %v1081
    %1083 = vmatpush.msra.mxu0 %v1082
    %v1084 = vand.u32 %v925, 4294901760
    %v1085 = vsub.f32 %v925, %v1084
    %1086 = vmatpush.msra.mxu0 %v1085
    %v1087 = vand.u32 %v924, 4294901760
    %v1088 = vsub.f32 %v924, %v1087
    %1089 = vmatpush.msra.mxu0 %v1088
    %v1090 = vand.u32 %v923, 4294901760
    %v1091 = vsub.f32 %v923, %v1090
    %1092 = vmatpush.msra.mxu0 %v1091
    %v1093 = vand.u32 %v922, 4294901760
    %v1094 = vsub.f32 %v922, %v1093
    %1095 = vmatpush.msra.mxu0 %v1094
    %v1096 = vand.u32 %v921, 4294901760
    %v1097 = vsub.f32 %v921, %v1096
    %1098 = vmatpush.msra.mxu0 %v1097
    %v1099 = vand.u32 %v920, 4294901760
    %v1100 = vsub.f32 %v920, %v1099
    %1101 = vmatpush.msra.mxu0 %v1100
    %v1102 = vand.u32 %v919, 4294901760
    %v1103 = vsub.f32 %v919, %v1102
    %1104 = vmatpush.msra.mxu0 %v1103
    %v1105 = vand.u32 %v918, 4294901760
    %v1106 = vsub.f32 %v918, %v1105
    %1107 = vmatpush.msra.mxu0 %v1106
    %v1108 = vand.u32 %v917, 4294901760
    %v1109 = vsub.f32 %v917, %v1108
    %1110 = vmatpush.msra.mxu0 %v1109
    %v1111 = vand.u32 %v916, 4294901760
    %v1112 = vsub.f32 %v916, %v1111
    %1113 = vmatpush.msra.mxu0 %v1112
    %v1114 = vand.u32 %v915, 4294901760
    %v1115 = vsub.f32 %v915, %v1114
    %1116 = vmatpush.msra.mxu0 %v1115
    %v1117 = vand.u32 %v914, 4294901760
    %v1118 = vsub.f32 %v914, %v1117
    %1119 = vmatpush.msra.mxu0 %v1118
    %v1120 = vand.u32 %v900, 4294901760
    %v1121 = vsub.f32 %v900, %v1120
    %1122 = vmatmul.f32.gmra.mxu0 %v1121
    %v1123 = vpop.f32.mrf.mxu0
    %v1124 = vadd.f32 %v1070, %v1123
    %1125 = vdwg.mxu0
    %v1126 = vand.u32 %v929, 4294901760
    %1127 = vmatpush.msra.mxu0 %v1126
    %v1128 = vand.u32 %v928, 4294901760
    %1129 = vmatpush.msra.mxu0 %v1128
    %v1130 = vand.u32 %v927, 4294901760
    %1131 = vmatpush.msra.mxu0 %v1130
    %v1132 = vand.u32 %v926, 4294901760
    %1133 = vmatpush.msra.mxu0 %v1132
    %v1134 = vand.u32 %v925, 4294901760
    %1135 = vmatpush.msra.mxu0 %v1134
    %v1136 = vand.u32 %v924, 4294901760
    %1137 = vmatpush.msra.mxu0 %v1136
    %v1138 = vand.u32 %v923, 4294901760
    %1139 = vmatpush.msra.mxu0 %v1138
    %v1140 = vand.u32 %v922, 4294901760
    %1141 = vmatpush.msra.mxu0 %v1140
    %v1142 = vand.u32 %v921, 4294901760
    %1143 = vmatpush.msra.mxu0 %v1142
    %v1144 = vand.u32 %v920, 4294901760
    %1145 = vmatpush.msra.mxu0 %v1144
    %v1146 = vand.u32 %v919, 4294901760
    %1147 = vmatpush.msra.mxu0 %v1146
    %v1148 = vand.u32 %v918, 4294901760
    %1149 = vmatpush.msra.mxu0 %v1148
    %v1150 = vand.u32 %v917, 4294901760
    %1151 = vmatpush.msra.mxu0 %v1150
    %v1152 = vand.u32 %v916, 4294901760
    %1153 = vmatpush.msra.mxu0 %v1152
    %v1154 = vand.u32 %v915, 4294901760
    %1155 = vmatpush.msra.mxu0 %v1154
    %v1156 = vand.u32 %v914, 4294901760
    %1157 = vmatpush.msra.mxu0 %v1156
    %v1158 = vand.u32 %v900, 4294901760
    %v1159 = vsub.f32 %v900, %v1158
    %v1160 = vand.u32 %v1159, 4294901760
    %1161 = vmatmul.f32.gmra.mxu0 %v1160
    %v1162 = vpop.f32.mrf.mxu0
    %v1163 = vadd.f32 %v1124, %v1162
    %1164 = vdwg.mxu0
    %v1165 = vand.u32 %v929, 4294901760
    %v1166 = vsub.f32 %v929, %v1165
    %v1167 = vand.u32 %v1166, 4294901760
    %1168 = vmatpush.msra.mxu0 %v1167
    %v1169 = vand.u32 %v928, 4294901760
    %v1170 = vsub.f32 %v928, %v1169
    %v1171 = vand.u32 %v1170, 4294901760
    %1172 = vmatpush.msra.mxu0 %v1171
    %v1173 = vand.u32 %v927, 4294901760
    %v1174 = vsub.f32 %v927, %v1173
    %v1175 = vand.u32 %v1174, 4294901760
    %1176 = vmatpush.msra.mxu0 %v1175
    %v1177 = vand.u32 %v926, 4294901760
    %v1178 = vsub.f32 %v926, %v1177
    %v1179 = vand.u32 %v1178, 4294901760
    %1180 = vmatpush.msra.mxu0 %v1179
    %v1181 = vand.u32 %v925, 4294901760
    %v1182 = vsub.f32 %v925, %v1181
    %v1183 = vand.u32 %v1182, 4294901760
    %1184 = vmatpush.msra.mxu0 %v1183
    %v1185 = vand.u32 %v924, 4294901760
    %v1186 = vsub.f32 %v924, %v1185
    %v1187 = vand.u32 %v1186, 4294901760
    %1188 = vmatpush.msra.mxu0 %v1187
    %v1189 = vand.u32 %v923, 4294901760
    %v1190 = vsub.f32 %v923, %v1189
    %v1191 = vand.u32 %v1190, 4294901760
    %1192 = vmatpush.msra.mxu0 %v1191
    %v1193 = vand.u32 %v922, 4294901760
    %v1194 = vsub.f32 %v922, %v1193
    %v1195 = vand.u32 %v1194, 4294901760
    %1196 = vmatpush.msra.mxu0 %v1195
    %v1197 = vand.u32 %v921, 4294901760
    %v1198 = vsub.f32 %v921, %v1197
    %v1199 = vand.u32 %v1198, 4294901760
    %1200 = vmatpush.msra.mxu0 %v1199
    %v1201 = vand.u32 %v920, 4294901760
    %v1202 = vsub.f32 %v920, %v1201
    %v1203 = vand.u32 %v1202, 4294901760
    %1204 = vmatpush.msra.mxu0 %v1203
    %v1205 = vand.u32 %v919, 4294901760
    %v1206 = vsub.f32 %v919, %v1205
    %v1207 = vand.u32 %v1206, 4294901760
    %1208 = vmatpush.msra.mxu0 %v1207
    %v1209 = vand.u32 %v918, 4294901760
    %v1210 = vsub.f32 %v918, %v1209
    %v1211 = vand.u32 %v1210, 4294901760
    %1212 = vmatpush.msra.mxu0 %v1211
    %v1213 = vand.u32 %v917, 4294901760
    %v1214 = vsub.f32 %v917, %v1213
    %v1215 = vand.u32 %v1214, 4294901760
    %1216 = vmatpush.msra.mxu0 %v1215
    %v1217 = vand.u32 %v916, 4294901760
    %v1218 = vsub.f32 %v916, %v1217
    %v1219 = vand.u32 %v1218, 4294901760
    %1220 = vmatpush.msra.mxu0 %v1219
    %v1221 = vand.u32 %v915, 4294901760
    %v1222 = vsub.f32 %v915, %v1221
    %v1223 = vand.u32 %v1222, 4294901760
    %1224 = vmatpush.msra.mxu0 %v1223
    %v1225 = vand.u32 %v914, 4294901760
    %v1226 = vsub.f32 %v914, %v1225
    %v1227 = vand.u32 %v1226, 4294901760
    %1228 = vmatpush.msra.mxu0 %v1227
    %v1229 = vand.u32 %v900, 4294901760
    %1230 = vmatmul.f32.gmra.mxu0 %v1229
    %v1231 = vpop.f32.mrf.mxu0
    %v1232 = vadd.f32 %v1163, %v1231
    %1233 = vdwg.mxu0
    %v1234 = vand.u32 %v929, 4294901760
    %1235 = vmatpush.msra.mxu0 %v1234
    %v1236 = vand.u32 %v928, 4294901760
    %1237 = vmatpush.msra.mxu0 %v1236
    %v1238 = vand.u32 %v927, 4294901760
    %1239 = vmatpush.msra.mxu0 %v1238
    %v1240 = vand.u32 %v926, 4294901760
    %1241 = vmatpush.msra.mxu0 %v1240
    %v1242 = vand.u32 %v925, 4294901760
    %1243 = vmatpush.msra.mxu0 %v1242
    %v1244 = vand.u32 %v924, 4294901760
    %1245 = vmatpush.msra.mxu0 %v1244
    %v1246 = vand.u32 %v923, 4294901760
    %1247 = vmatpush.msra.mxu0 %v1246
    %v1248 = vand.u32 %v922, 4294901760
    %1249 = vmatpush.msra.mxu0 %v1248
    %v1250 = vand.u32 %v921, 4294901760
    %1251 = vmatpush.msra.mxu0 %v1250
    %v1252 = vand.u32 %v920, 4294901760
    %1253 = vmatpush.msra.mxu0 %v1252
    %v1254 = vand.u32 %v919, 4294901760
    %1255 = vmatpush.msra.mxu0 %v1254
    %v1256 = vand.u32 %v918, 4294901760
    %1257 = vmatpush.msra.mxu0 %v1256
    %v1258 = vand.u32 %v917, 4294901760
    %1259 = vmatpush.msra.mxu0 %v1258
    %v1260 = vand.u32 %v916, 4294901760
    %1261 = vmatpush.msra.mxu0 %v1260
    %v1262 = vand.u32 %v915, 4294901760
    %1263 = vmatpush.msra.mxu0 %v1262
    %v1264 = vand.u32 %v914, 4294901760
    %1265 = vmatpush.msra.mxu0 %v1264
    %v1266 = vand.u32 %v900, 4294901760
    %1267 = vmatmul.f32.gmra.mxu0 %v1266
    %v1268 = vpop.f32.mrf.mxu0
    %v1269 = vadd.f32 %v1232, %v1268
    %1270 = vdwg.mxu0
    %v1271 = vand.u32 %v929, 4294901760
    %1272 = vmatpush.msra.mxu0 %v1271
    %v1273 = vand.u32 %v928, 4294901760
    %1274 = vmatpush.msra.mxu0 %v1273
    %v1275 = vand.u32 %v927, 4294901760
    %1276 = vmatpush.msra.mxu0 %v1275
    %v1277 = vand.u32 %v926, 4294901760
    %1278 = vmatpush.msra.mxu0 %v1277
    %v1279 = vand.u32 %v925, 4294901760
    %1280 = vmatpush.msra.mxu0 %v1279
    %v1281 = vand.u32 %v924, 4294901760
    %1282 = vmatpush.msra.mxu0 %v1281
    %v1283 = vand.u32 %v923, 4294901760
    %1284 = vmatpush.msra.mxu0 %v1283
    %v1285 = vand.u32 %v922, 4294901760
    %1286 = vmatpush.msra.mxu0 %v1285
    %v1287 = vand.u32 %v921, 4294901760
    %1288 = vmatpush.msra.mxu0 %v1287
    %v1289 = vand.u32 %v920, 4294901760
    %1290 = vmatpush.msra.mxu0 %v1289
    %v1291 = vand.u32 %v919, 4294901760
    %1292 = vmatpush.msra.mxu0 %v1291
    %v1293 = vand.u32 %v918, 4294901760
    %1294 = vmatpush.msra.mxu0 %v1293
    %v1295 = vand.u32 %v917, 4294901760
    %1296 = vmatpush.msra.mxu0 %v1295
    %v1297 = vand.u32 %v916, 4294901760
    %1298 = vmatpush.msra.mxu0 %v1297
    %v1299 = vand.u32 %v915, 4294901760
    %1300 = vmatpush.msra.mxu0 %v1299
    %v1301 = vand.u32 %v914, 4294901760
    %1302 = vmatpush.msra.mxu0 %v1301
    %v1303 = vand.u32 %v913, 4294901760
    %v1304 = vsub.f32 %v913, %v1303
    %v1305 = vand.u32 %v1304, 4294901760
    %v1306 = vsub.f32 %v1304, %v1305
    %v1307 = vand.u32 %v1306, 4294901760
    %1308 = vmatmul.f32.gmra.mxu0 %v1307
    %v1309 = vpop.f32.mrf.mxu0
    %v1310 = vadd.f32 0.0, %v1309
    %1311 = vdwg.mxu0
    %v1312 = vand.u32 %v929, 4294901760
    %v1313 = vsub.f32 %v929, %v1312
    %v1314 = vand.u32 %v1313, 4294901760
    %v1315 = vsub.f32 %v1313, %v1314
    %v1316 = vand.u32 %v1315, 4294901760
    %1317 = vmatpush.msra.mxu0 %v1316
    %v1318 = vand.u32 %v928, 4294901760
    %v1319 = vsub.f32 %v928, %v1318
    %v1320 = vand.u32 %v1319, 4294901760
    %v1321 = vsub.f32 %v1319, %v1320
    %v1322 = vand.u32 %v1321, 4294901760
    %1323 = vmatpush.msra.mxu0 %v1322
    %v1324 = vand.u32 %v927, 4294901760
    %v1325 = vsub.f32 %v927, %v1324
    %v1326 = vand.u32 %v1325, 4294901760
    %v1327 = vsub.f32 %v1325, %v1326
    %v1328 = vand.u32 %v1327, 4294901760
    %1329 = vmatpush.msra.mxu0 %v1328
    %v1330 = vand.u32 %v926, 4294901760
    %v1331 = vsub.f32 %v926, %v1330
    %v1332 = vand.u32 %v1331, 4294901760
    %v1333 = vsub.f32 %v1331, %v1332
    %v1334 = vand.u32 %v1333, 4294901760
    %1335 = vmatpush.msra.mxu0 %v1334
    %v1336 = vand.u32 %v925, 4294901760
    %v1337 = vsub.f32 %v925, %v1336
    %v1338 = vand.u32 %v1337, 4294901760
    %v1339 = vsub.f32 %v1337, %v1338
    %v1340 = vand.u32 %v1339, 4294901760
    %1341 = vmatpush.msra.mxu0 %v1340
    %v1342 = vand.u32 %v924, 4294901760
    %v1343 = vsub.f32 %v924, %v1342
    %v1344 = vand.u32 %v1343, 4294901760
    %v1345 = vsub.f32 %v1343, %v1344
    %v1346 = vand.u32 %v1345, 4294901760
    %1347 = vmatpush.msra.mxu0 %v1346
    %v1348 = vand.u32 %v923, 4294901760
    %v1349 = vsub.f32 %v923, %v1348
    %v1350 = vand.u32 %v1349, 4294901760
    %v1351 = vsub.f32 %v1349, %v1350
    %v1352 = vand.u32 %v1351, 4294901760
    %1353 = vmatpush.msra.mxu0 %v1352
    %v1354 = vand.u32 %v922, 4294901760
    %v1355 = vsub.f32 %v922, %v1354
    %v1356 = vand.u32 %v1355, 4294901760
    %v1357 = vsub.f32 %v1355, %v1356
    %v1358 = vand.u32 %v1357, 4294901760
    %1359 = vmatpush.msra.mxu0 %v1358
    %v1360 = vand.u32 %v921, 4294901760
    %v1361 = vsub.f32 %v921, %v1360
    %v1362 = vand.u32 %v1361, 4294901760
    %v1363 = vsub.f32 %v1361, %v1362
    %v1364 = vand.u32 %v1363, 4294901760
    %1365 = vmatpush.msra.mxu0 %v1364
    %v1366 = vand.u32 %v920, 4294901760
    %v1367 = vsub.f32 %v920, %v1366
    %v1368 = vand.u32 %v1367, 4294901760
    %v1369 = vsub.f32 %v1367, %v1368
    %v1370 = vand.u32 %v1369, 4294901760
    %1371 = vmatpush.msra.mxu0 %v1370
    %v1372 = vand.u32 %v919, 4294901760
    %v1373 = vsub.f32 %v919, %v1372
    %v1374 = vand.u32 %v1373, 4294901760
    %v1375 = vsub.f32 %v1373, %v1374
    %v1376 = vand.u32 %v1375, 4294901760
    %1377 = vmatpush.msra.mxu0 %v1376
    %v1378 = vand.u32 %v918, 4294901760
    %v1379 = vsub.f32 %v918, %v1378
    %v1380 = vand.u32 %v1379, 4294901760
    %v1381 = vsub.f32 %v1379, %v1380
    %v1382 = vand.u32 %v1381, 4294901760
    %1383 = vmatpush.msra.mxu0 %v1382
    %v1384 = vand.u32 %v917, 4294901760
    %v1385 = vsub.f32 %v917, %v1384
    %v1386 = vand.u32 %v1385, 4294901760
    %v1387 = vsub.f32 %v1385, %v1386
    %v1388 = vand.u32 %v1387, 4294901760
    %1389 = vmatpush.msra.mxu0 %v1388
    %v1390 = vand.u32 %v916, 4294901760
    %v1391 = vsub.f32 %v916, %v1390
    %v1392 = vand.u32 %v1391, 4294901760
    %v1393 = vsub.f32 %v1391, %v1392
    %v1394 = vand.u32 %v1393, 4294901760
    %1395 = vmatpush.msra.mxu0 %v1394
    %v1396 = vand.u32 %v915, 4294901760
    %v1397 = vsub.f32 %v915, %v1396
    %v1398 = vand.u32 %v1397, 4294901760
    %v1399 = vsub.f32 %v1397, %v1398
    %v1400 = vand.u32 %v1399, 4294901760
    %1401 = vmatpush.msra.mxu0 %v1400
    %v1402 = vand.u32 %v914, 4294901760
    %v1403 = vsub.f32 %v914, %v1402
    %v1404 = vand.u32 %v1403, 4294901760
    %v1405 = vsub.f32 %v1403, %v1404
    %v1406 = vand.u32 %v1405, 4294901760
    %1407 = vmatpush.msra.mxu0 %v1406
    %v1408 = vand.u32 %v913, 4294901760
    %1409 = vmatmul.f32.gmra.mxu0 %v1408
    %v1410 = vpop.f32.mrf.mxu0
    %v1411 = vadd.f32 %v1310, %v1410
    %1412 = vdwg.mxu0
    %v1413 = vand.u32 %v929, 4294901760
    %v1414 = vsub.f32 %v929, %v1413
    %1415 = vmatpush.msra.mxu0 %v1414
    %v1416 = vand.u32 %v928, 4294901760
    %v1417 = vsub.f32 %v928, %v1416
    %1418 = vmatpush.msra.mxu0 %v1417
    %v1419 = vand.u32 %v927, 4294901760
    %v1420 = vsub.f32 %v927, %v1419
    %1421 = vmatpush.msra.mxu0 %v1420
    %v1422 = vand.u32 %v926, 4294901760
    %v1423 = vsub.f32 %v926, %v1422
    %1424 = vmatpush.msra.mxu0 %v1423
    %v1425 = vand.u32 %v925, 4294901760
    %v1426 = vsub.f32 %v925, %v1425
    %1427 = vmatpush.msra.mxu0 %v1426
    %v1428 = vand.u32 %v924, 4294901760
    %v1429 = vsub.f32 %v924, %v1428
    %1430 = vmatpush.msra.mxu0 %v1429
    %v1431 = vand.u32 %v923, 4294901760
    %v1432 = vsub.f32 %v923, %v1431
    %1433 = vmatpush.msra.mxu0 %v1432
    %v1434 = vand.u32 %v922, 4294901760
    %v1435 = vsub.f32 %v922, %v1434
    %1436 = vmatpush.msra.mxu0 %v1435
    %v1437 = vand.u32 %v921, 4294901760
    %v1438 = vsub.f32 %v921, %v1437
    %1439 = vmatpush.msra.mxu0 %v1438
    %v1440 = vand.u32 %v920, 4294901760
    %v1441 = vsub.f32 %v920, %v1440
    %1442 = vmatpush.msra.mxu0 %v1441
    %v1443 = vand.u32 %v919, 4294901760
    %v1444 = vsub.f32 %v919, %v1443
    %1445 = vmatpush.msra.mxu0 %v1444
    %v1446 = vand.u32 %v918, 4294901760
    %v1447 = vsub.f32 %v918, %v1446
    %1448 = vmatpush.msra.mxu0 %v1447
    %v1449 = vand.u32 %v917, 4294901760
    %v1450 = vsub.f32 %v917, %v1449
    %1451 = vmatpush.msra.mxu0 %v1450
    %v1452 = vand.u32 %v916, 4294901760
    %v1453 = vsub.f32 %v916, %v1452
    %1454 = vmatpush.msra.mxu0 %v1453
    %v1455 = vand.u32 %v915, 4294901760
    %v1456 = vsub.f32 %v915, %v1455
    %1457 = vmatpush.msra.mxu0 %v1456
    %v1458 = vand.u32 %v914, 4294901760
    %v1459 = vsub.f32 %v914, %v1458
    %1460 = vmatpush.msra.mxu0 %v1459
    %v1461 = vand.u32 %v913, 4294901760
    %v1462 = vsub.f32 %v913, %v1461
    %1463 = vmatmul.f32.gmra.mxu0 %v1462
    %v1464 = vpop.f32.mrf.mxu0
    %v1465 = vadd.f32 %v1411, %v1464
    %1466 = vdwg.mxu0
    %v1467 = vand.u32 %v929, 4294901760
    %1468 = vmatpush.msra.mxu0 %v1467
    %v1469 = vand.u32 %v928, 4294901760
    %1470 = vmatpush.msra.mxu0 %v1469
    %v1471 = vand.u32 %v927, 4294901760
    %1472 = vmatpush.msra.mxu0 %v1471
    %v1473 = vand.u32 %v926, 4294901760
    %1474 = vmatpush.msra.mxu0 %v1473
    %v1475 = vand.u32 %v925, 4294901760
    %1476 = vmatpush.msra.mxu0 %v1475
    %v1477 = vand.u32 %v924, 4294901760
    %1478 = vmatpush.msra.mxu0 %v1477
    %v1479 = vand.u32 %v923, 4294901760
    %1480 = vmatpush.msra.mxu0 %v1479
    %v1481 = vand.u32 %v922, 4294901760
    %1482 = vmatpush.msra.mxu0 %v1481
    %v1483 = vand.u32 %v921, 4294901760
    %1484 = vmatpush.msra.mxu0 %v1483
    %v1485 = vand.u32 %v920, 4294901760
    %1486 = vmatpush.msra.mxu0 %v1485
    %v1487 = vand.u32 %v919, 4294901760
    %1488 = vmatpush.msra.mxu0 %v1487
    %v1489 = vand.u32 %v918, 4294901760
    %1490 = vmatpush.msra.mxu0 %v1489
    %v1491 = vand.u32 %v917, 4294901760
    %1492 = vmatpush.msra.mxu0 %v1491
    %v1493 = vand.u32 %v916, 4294901760
    %1494 = vmatpush.msra.mxu0 %v1493
    %v1495 = vand.u32 %v915, 4294901760
    %1496 = vmatpush.msra.mxu0 %v1495
    %v1497 = vand.u32 %v914, 4294901760
    %1498 = vmatpush.msra.mxu0 %v1497
    %v1499 = vand.u32 %v913, 4294901760
    %v1500 = vsub.f32 %v913, %v1499
    %v1501 = vand.u32 %v1500, 4294901760
    %1502 = vmatmul.f32.gmra.mxu0 %v1501
    %v1503 = vpop.f32.mrf.mxu0
    %v1504 = vadd.f32 %v1465, %v1503
    %1505 = vdwg.mxu0
    %v1506 = vand.u32 %v929, 4294901760
    %v1507 = vsub.f32 %v929, %v1506
    %v1508 = vand.u32 %v1507, 4294901760
    %1509 = vmatpush.msra.mxu0 %v1508
    %v1510 = vand.u32 %v928, 4294901760
    %v1511 = vsub.f32 %v928, %v1510
    %v1512 = vand.u32 %v1511, 4294901760
    %1513 = vmatpush.msra.mxu0 %v1512
    %v1514 = vand.u32 %v927, 4294901760
    %v1515 = vsub.f32 %v927, %v1514
    %v1516 = vand.u32 %v1515, 4294901760
    %1517 = vmatpush.msra.mxu0 %v1516
    %v1518 = vand.u32 %v926, 4294901760
    %v1519 = vsub.f32 %v926, %v1518
    %v1520 = vand.u32 %v1519, 4294901760
    %1521 = vmatpush.msra.mxu0 %v1520
    %v1522 = vand.u32 %v925, 4294901760
    %v1523 = vsub.f32 %v925, %v1522
    %v1524 = vand.u32 %v1523, 4294901760
    %1525 = vmatpush.msra.mxu0 %v1524
    %v1526 = vand.u32 %v924, 4294901760
    %v1527 = vsub.f32 %v924, %v1526
    %v1528 = vand.u32 %v1527, 4294901760
    %1529 = vmatpush.msra.mxu0 %v1528
    %v1530 = vand.u32 %v923, 4294901760
    %v1531 = vsub.f32 %v923, %v1530
    %v1532 = vand.u32 %v1531, 4294901760
    %1533 = vmatpush.msra.mxu0 %v1532
    %v1534 = vand.u32 %v922, 4294901760
    %v1535 = vsub.f32 %v922, %v1534
    %v1536 = vand.u32 %v1535, 4294901760
    %1537 = vmatpush.msra.mxu0 %v1536
    %v1538 = vand.u32 %v921, 4294901760
    %v1539 = vsub.f32 %v921, %v1538
    %v1540 = vand.u32 %v1539, 4294901760
    %1541 = vmatpush.msra.mxu0 %v1540
    %v1542 = vand.u32 %v920, 4294901760
    %v1543 = vsub.f32 %v920, %v1542
    %v1544 = vand.u32 %v1543, 4294901760
    %1545 = vmatpush.msra.mxu0 %v1544
    %v1546 = vand.u32 %v919, 4294901760
    %v1547 = vsub.f32 %v919, %v1546
    %v1548 = vand.u32 %v1547, 4294901760
    %1549 = vmatpush.msra.mxu0 %v1548
    %v1550 = vand.u32 %v918, 4294901760
    %v1551 = vsub.f32 %v918, %v1550
    %v1552 = vand.u32 %v1551, 4294901760
    %1553 = vmatpush.msra.mxu0 %v1552
    %v1554 = vand.u32 %v917, 4294901760
    %v1555 = vsub.f32 %v917, %v1554
    %v1556 = vand.u32 %v1555, 4294901760
    %1557 = vmatpush.msra.mxu0 %v1556
    %v1558 = vand.u32 %v916, 4294901760
    %v1559 = vsub.f32 %v916, %v1558
    %v1560 = vand.u32 %v1559, 4294901760
    %1561 = vmatpush.msra.mxu0 %v1560
    %v1562 = vand.u32 %v915, 4294901760
    %v1563 = vsub.f32 %v915, %v1562
    %v1564 = vand.u32 %v1563, 4294901760
    %1565 = vmatpush.msra.mxu0 %v1564
    %v1566 = vand.u32 %v914, 4294901760
    %v1567 = vsub.f32 %v914, %v1566
    %v1568 = vand.u32 %v1567, 4294901760
    %1569 = vmatpush.msra.mxu0 %v1568
    %v1570 = vand.u32 %v913, 4294901760
    %1571 = vmatmul.f32.gmra.mxu0 %v1570
    %v1572 = vpop.f32.mrf.mxu0
    %v1573 = vadd.f32 %v1504, %v1572
    %1574 = vdwg.mxu0
    %v1575 = vand.u32 %v929, 4294901760
    %1576 = vmatpush.msra.mxu0 %v1575
    %v1577 = vand.u32 %v928, 4294901760
    %1578 = vmatpush.msra.mxu0 %v1577
    %v1579 = vand.u32 %v927, 4294901760
    %1580 = vmatpush.msra.mxu0 %v1579
    %v1581 = vand.u32 %v926, 4294901760
    %1582 = vmatpush.msra.mxu0 %v1581
    %v1583 = vand.u32 %v925, 4294901760
    %1584 = vmatpush.msra.mxu0 %v1583
    %v1585 = vand.u32 %v924, 4294901760
    %1586 = vmatpush.msra.mxu0 %v1585
    %v1587 = vand.u32 %v923, 4294901760
    %1588 = vmatpush.msra.mxu0 %v1587
    %v1589 = vand.u32 %v922, 4294901760
    %1590 = vmatpush.msra.mxu0 %v1589
    %v1591 = vand.u32 %v921, 4294901760
    %1592 = vmatpush.msra.mxu0 %v1591
    %v1593 = vand.u32 %v920, 4294901760
    %1594 = vmatpush.msra.mxu0 %v1593
    %v1595 = vand.u32 %v919, 4294901760
    %1596 = vmatpush.msra.mxu0 %v1595
    %v1597 = vand.u32 %v918, 4294901760
    %1598 = vmatpush.msra.mxu0 %v1597
    %v1599 = vand.u32 %v917, 4294901760
    %1600 = vmatpush.msra.mxu0 %v1599
    %v1601 = vand.u32 %v916, 4294901760
    %1602 = vmatpush.msra.mxu0 %v1601
    %v1603 = vand.u32 %v915, 4294901760
    %1604 = vmatpush.msra.mxu0 %v1603
    %v1605 = vand.u32 %v914, 4294901760
    %1606 = vmatpush.msra.mxu0 %v1605
    %v1607 = vand.u32 %v913, 4294901760
    %1608 = vmatmul.f32.gmra.mxu0 %v1607
    %v1609 = vpop.f32.mrf.mxu0
    %v1610 = vadd.f32 %v1573, %v1609
    %1611 = vdwg.mxu0
    %v1612 = vmul.f32 %v1269, 0.001953125
    %v1613 = vmul.f32 %v1610, 0.001953125
    %v1614 = vmul.f32 %v1612, %v1612
    %v1615 = vsub.f32 %v1613, %v1614
    %v1616 = vmax.f32 %v1615, 0.0
    %v1617 = vadd.f32 %v1616, 1e-05
    %v1618 = vrsqrt.pop %v1617
    %v1619 = vmul.f32 %v1618, %v1617
    %v1620 = vmul.f32 %v1619, %v1618
    %v1621 = vmul.f32 0.5, %v1620
    %v1622 = vsub.f32 1.5, %v1621
    %v1623 = vmul.f32 %v1618, %v1622
    %vm1624 = vweird.f32 %v1617
    %vm1625 = vweird.f32 %v1618
    %vm1626 = vmor %vm1624, %vm1625
    %v1627 = vsel %vm1626, %v1618, %v1623
    %v1628 = vld [vmem:[%s7] sm:$0x1]
    %v1629 = vmul.f32 %v1627, %v1628
    %v1630 = vperm.slane %v1612, 0
    %v1631 = vsub.f32 %v888, %v1630
    %v1632 = vsub.f32 %v889, %v1630
    %v1633 = vsub.f32 %v890, %v1630
    %v1634 = vsub.f32 %v891, %v1630
    %v1635 = vperm.slane %v1629, 0
    %v1636 = vmul.f32 %v1631, %v1635
    %v1637 = vmul.f32 %v1632, %v1635
    %v1638 = vmul.f32 %v1633, %v1635
    %v1639 = vmul.f32 %v1634, %v1635
    %v1640 = vld [vmem:[%s8] sm:$0x1]
    %v1642 = vperm.slane %v1640, 0
    %v1644 = vadd.f32 %v1636, %v1642
    %v1645 = vadd.f32 %v1637, %v1642
    %v1646 = vadd.f32 %v1638, %v1642
    %v1647 = vadd.f32 %v1639, %v1642
    %s1648 = scalar_lea.vmem %s10, 128
    %v1649 = vld [vmem:[%s1648] sm:$0xff]
    %v1650 = vld [vmem:[%s1648 + $0x8] sm:$0xff]
    %v1651 = vld [vmem:[%s1648 + $0x10] sm:$0xff]
    %v1652 = vld [vmem:[%s1648 + $0x18] sm:$0xff]
    %v1653 = vld [vmem:[%s1648 + $0x20] sm:$0xff]
    %v1654 = vld [vmem:[%s1648 + $0x28] sm:$0xff]
    %v1655 = vld [vmem:[%s1648 + $0x30] sm:$0xff]
    %v1656 = vld [vmem:[%s1648 + $0x38] sm:$0xff]
    %v1657 = vld [vmem:[%s1648 + $0x40] sm:$0xff]
    %v1658 = vld [vmem:[%s1648 + $0x48] sm:$0xff]
    %v1659 = vld [vmem:[%s1648 + $0x50] sm:$0xff]
    %v1660 = vld [vmem:[%s1648 + $0x58] sm:$0xff]
    %v1661 = vld [vmem:[%s1648 + $0x60] sm:$0xff]
    %v1662 = vld [vmem:[%s1648 + $0x68] sm:$0xff]
    %v1663 = vld [vmem:[%s1648 + $0x70] sm:$0xff]
    %v1664 = vld [vmem:[%s1648 + $0x78] sm:$0xff]
    %1665 = vmatpush.msra.mxu0 0.0
    %1666 = vmatpush.msra.mxu0 0.0
    %1667 = vmatpush.msra.mxu0 0.0
    %1668 = vmatpush.msra.mxu0 0.0
    %1669 = vmatpush.msra.mxu0 0.0
    %1670 = vmatpush.msra.mxu0 0.0
    %1671 = vmatpush.msra.mxu0 0.0
    %1672 = vmatpush.msra.mxu0 0.0
    %1673 = vmatpush.msra.mxu0 0.0
    %1674 = vmatpush.msra.mxu0 0.0
    %1675 = vmatpush.msra.mxu0 0.0
    %1676 = vmatpush.msra.mxu0 0.0
    %1677 = vmatpush.msra.mxu0 %v1647
    %1678 = vmatpush.msra.mxu0 %v1646
    %1679 = vmatpush.msra.mxu0 %v1645
    %1680 = vmatpush.msra.mxu0 %v1644
    %1681 = vmatmul.f32.gmra.mxu0 %v663
    %v1682 = vpop.f32.mrf.mxu0
    %v1683 = vadd.f32 0.0, %v1682
    %1684 = vmatmul.f32.gmra.mxu0 %v666
    %v1685 = vpop.f32.mrf.mxu0
    %v1686 = vadd.f32 0.0, %v1685
    %1687 = vmatmul.f32.gmra.mxu0 %v669
    %v1688 = vpop.f32.mrf.mxu0
    %v1689 = vadd.f32 0.0, %v1688
    %1690 = vmatmul.f32.gmra.mxu0 %v672
    %v1691 = vpop.f32.mrf.mxu0
    %v1692 = vadd.f32 0.0, %v1691
    %1693 = vdwg.mxu0
    %v1694 = vld [vmem:[%s10] sm:$0xff]
    %v1695 = vld [vmem:[%s10 + $0x8] sm:$0xff]
    %v1696 = vld [vmem:[%s10 + $0x10] sm:$0xff]
    %v1697 = vld [vmem:[%s10 + $0x18] sm:$0xff]
    %v1698 = vld [vmem:[%s10 + $0x20] sm:$0xff]
    %v1699 = vld [vmem:[%s10 + $0x28] sm:$0xff]
    %v1700 = vld [vmem:[%s10 + $0x30] sm:$0xff]
    %v1701 = vld [vmem:[%s10 + $0x38] sm:$0xff]
    %v1702 = vld [vmem:[%s10 + $0x40] sm:$0xff]
    %v1703 = vld [vmem:[%s10 + $0x48] sm:$0xff]
    %v1704 = vld [vmem:[%s10 + $0x50] sm:$0xff]
    %v1705 = vld [vmem:[%s10 + $0x58] sm:$0xff]
    %v1706 = vld [vmem:[%s10 + $0x60] sm:$0xff]
    %v1707 = vld [vmem:[%s10 + $0x68] sm:$0xff]
    %v1708 = vld [vmem:[%s10 + $0x70] sm:$0xff]
    %v1709 = vld [vmem:[%s10 + $0x78] sm:$0xff]
    %1710 = vmatpush.msra.mxu0 %v1709
    %1711 = vmatpush.msra.mxu0 %v1708
    %1712 = vmatpush.msra.mxu0 %v1707
    %1713 = vmatpush.msra.mxu0 %v1706
    %1714 = vmatpush.msra.mxu0 %v1705
    %1715 = vmatpush.msra.mxu0 %v1704
    %1716 = vmatpush.msra.mxu0 %v1703
    %1717 = vmatpush.msra.mxu0 %v1702
    %1718 = vmatpush.msra.mxu0 %v1701
    %1719 = vmatpush.msra.mxu0 %v1700
    %1720 = vmatpush.msra.mxu0 %v1699
    %1721 = vmatpush.msra.mxu0 %v1698
    %1722 = vmatpush.msra.mxu0 %v1697
    %1723 = vmatpush.msra.mxu0 %v1696
    %1724 = vmatpush.msra.mxu0 %v1695
    %1725 = vmatpush.msra.mxu0 %v1694
    %1726 = vmatmul.f32.gmra.mxu0 %v1683
    %v1727 = vpop.f32.mrf.mxu0
    %v1728 = vadd.f32 0.0, %v1727
    %1729 = vmatmul.f32.gmra.mxu0 %v1686
    %v1730 = vpop.f32.mrf.mxu0
    %v1731 = vadd.f32 0.0, %v1730
    %1732 = vmatmul.f32.gmra.mxu0 %v1689
    %v1733 = vpop.f32.mrf.mxu0
    %v1734 = vadd.f32 0.0, %v1733
    %1735 = vmatmul.f32.gmra.mxu0 %v1692
    %v1736 = vpop.f32.mrf.mxu0
    %v1737 = vadd.f32 0.0, %v1736
    %1738 = vdwg.mxu0
    %1739 = vmatpush.msra.mxu0 %v1664
    %1740 = vmatpush.msra.mxu0 %v1663
    %1741 = vmatpush.msra.mxu0 %v1662
    %1742 = vmatpush.msra.mxu0 %v1661
    %1743 = vmatpush.msra.mxu0 %v1660
    %1744 = vmatpush.msra.mxu0 %v1659
    %1745 = vmatpush.msra.mxu0 %v1658
    %1746 = vmatpush.msra.mxu0 %v1657
    %1747 = vmatpush.msra.mxu0 %v1656
    %1748 = vmatpush.msra.mxu0 %v1655
    %1749 = vmatpush.msra.mxu0 %v1654
    %1750 = vmatpush.msra.mxu0 %v1653
    %1751 = vmatpush.msra.mxu0 %v1652
    %1752 = vmatpush.msra.mxu0 %v1651
    %1753 = vmatpush.msra.mxu0 %v1650
    %1754 = vmatpush.msra.mxu0 %v1649
    %1755 = vmatmul.f32.gmra.mxu0 %v1644
    %v1756 = vpop.f32.mrf.mxu0
    %v1757 = vadd.f32 %v1728, %v1756
    %1758 = vmatmul.f32.gmra.mxu0 %v1645
    %v1759 = vpop.f32.mrf.mxu0
    %v1760 = vadd.f32 %v1731, %v1759
    %1761 = vmatmul.f32.gmra.mxu0 %v1646
    %v1762 = vpop.f32.mrf.mxu0
    %v1763 = vadd.f32 %v1734, %v1762
    %1764 = vmatmul.f32.gmra.mxu0 %v1647
    %v1765 = vpop.f32.mrf.mxu0
    %v1766 = vadd.f32 %v1737, %v1765
    %1767 = vdwg.mxu0
    %1768 = vmatpush.msra.mxu0 0.0
    %1769 = vmatpush.msra.mxu0 0.0
    %1770 = vmatpush.msra.mxu0 0.0
    %1771 = vmatpush.msra.mxu0 0.0
    %1772 = vmatpush.msra.mxu0 0.0
    %1773 = vmatpush.msra.mxu0 0.0
    %1774 = vmatpush.msra.mxu0 0.0
    %1775 = vmatpush.msra.mxu0 0.0
    %1776 = vmatpush.msra.mxu0 0.0
    %1777 = vmatpush.msra.mxu0 0.0
    %1778 = vmatpush.msra.mxu0 0.0
    %1779 = vmatpush.msra.mxu0 0.0
    %1780 = vmatpush.msra.mxu0 %v1647
    %1781 = vmatpush.msra.mxu0 %v1646
    %1782 = vmatpush.msra.mxu0 %v1645
    %1783 = vmatpush.msra.mxu0 %v1644
    %1784 = vmatmul.f32.gmra.mxu0 %v794
    %v1785 = vpop.f32.mrf.mxu0
    %v1786 = vadd.f32 0.0, %v1785
    %1787 = vmatmul.f32.gmra.mxu0 %v797
    %v1788 = vpop.f32.mrf.mxu0
    %v1789 = vadd.f32 0.0, %v1788
    %1790 = vmatmul.f32.gmra.mxu0 %v800
    %v1791 = vpop.f32.mrf.mxu0
    %v1792 = vadd.f32 0.0, %v1791
    %1793 = vmatmul.f32.gmra.mxu0 %v803
    %v1794 = vpop.f32.mrf.mxu0
    %v1795 = vadd.f32 0.0, %v1794
    %1796 = vdwg.mxu0
    %s1797 = scalar_lea.vmem %s10, 256
    %v1798 = vld [vmem:[%s1797] sm:$0xff]
    %v1799 = vld [vmem:[%s1797 + $0x8] sm:$0xff]
    %v1800 = vld [vmem:[%s1797 + $0x10] sm:$0xff]
    %v1801 = vld [vmem:[%s1797 + $0x18] sm:$0xff]
    %v1802 = vld [vmem:[%s1797 + $0x20] sm:$0xff]
    %v1803 = vld [vmem:[%s1797 + $0x28] sm:$0xff]
    %v1804 = vld [vmem:[%s1797 + $0x30] sm:$0xff]
    %v1805 = vld [vmem:[%s1797 + $0x38] sm:$0xff]
    %v1806 = vld [vmem:[%s1797 + $0x40] sm:$0xff]
    %v1807 = vld [vmem:[%s1797 + $0x48] sm:$0xff]
    %v1808 = vld [vmem:[%s1797 + $0x50] sm:$0xff]
    %v1809 = vld [vmem:[%s1797 + $0x58] sm:$0xff]
    %v1810 = vld [vmem:[%s1797 + $0x60] sm:$0xff]
    %v1811 = vld [vmem:[%s1797 + $0x68] sm:$0xff]
    %v1812 = vld [vmem:[%s1797 + $0x70] sm:$0xff]
    %v1813 = vld [vmem:[%s1797 + $0x78] sm:$0xff]
    %1814 = vmatpush.msra.mxu0 %v1813
    %1815 = vmatpush.msra.mxu0 %v1812
    %1816 = vmatpush.msra.mxu0 %v1811
    %1817 = vmatpush.msra.mxu0 %v1810
    %1818 = vmatpush.msra.mxu0 %v1809
    %1819 = vmatpush.msra.mxu0 %v1808
    %1820 = vmatpush.msra.mxu0 %v1807
    %1821 = vmatpush.msra.mxu0 %v1806
    %1822 = vmatpush.msra.mxu0 %v1805
    %1823 = vmatpush.msra.mxu0 %v1804
    %1824 = vmatpush.msra.mxu0 %v1803
    %1825 = vmatpush.msra.mxu0 %v1802
    %1826 = vmatpush.msra.mxu0 %v1801
    %1827 = vmatpush.msra.mxu0 %v1800
    %1828 = vmatpush.msra.mxu0 %v1799
    %1829 = vmatpush.msra.mxu0 %v1798
    %1830 = vmatmul.f32.gmra.mxu0 %v1786
    %v1831 = vpop.f32.mrf.mxu0
    %v1832 = vadd.f32 0.0, %v1831
    %1833 = vmatmul.f32.gmra.mxu0 %v1789
    %v1834 = vpop.f32.mrf.mxu0
    %v1835 = vadd.f32 0.0, %v1834
    %1836 = vmatmul.f32.gmra.mxu0 %v1792
    %v1837 = vpop.f32.mrf.mxu0
    %v1838 = vadd.f32 0.0, %v1837
    %1839 = vmatmul.f32.gmra.mxu0 %v1795
    %v1840 = vpop.f32.mrf.mxu0
    %v1841 = vadd.f32 0.0, %v1840
    %1842 = vdwg.mxu0
    %v1843 = vadd.f32 %v1757, %v1832
    %v1844 = vadd.f32 %v1760, %v1835
    %v1845 = vadd.f32 %v1763, %v1838
    %v1846 = vadd.f32 %v1766, %v1841
    %v1847 = vmax.f32 %v1843, 0.0
    %v1848 = vmax.f32 %v1844, 0.0
    %v1849 = vmax.f32 %v1845, 0.0
    %v1850 = vmax.f32 %v1846, 0.0
    %1851 = vst [vmem:[%s11] sm:$0xff] %v1847
    %1852 = vst [vmem:[%s11 + $0x8] sm:$0xff] %v1848
    %1853 = vst [vmem:[%s11 + $0x10] sm:$0xff] %v1849
    %1854 = vst [vmem:[%s11 + $0x18] sm:$0xff] %v1850
    // Predicated region
    $region58: #{hand_pose_conv_block.1} parent=1 // pred_check
      _
    $region59: #{hand_pose_conv_block.1} parent=1 // pred_check_branch
      %1856 = sbr.rel (0) target = $region61
    $region60: #{hand_pose_conv_block.1} parent=1 // pred_region
      _
    $region61: #{hand_pose_conv_block.1} parent=1 // pred_fallthru
      _
    // Predicated region
    $region62: #{hand_pose_conv_block.1} parent=1 // pred_check
      _
    $region63: #{hand_pose_conv_block.1} parent=1 // pred_check_branch
      %1858 = sbr.rel (0) target = $region65
    $region64: #{hand_pose_conv_block.1} parent=1 // pred_region
      _
    $region65: #{hand_pose_conv_block.1} parent=1 // pred_fallthru
      _
    %1859 = vsyncpa [#allocation3], 1
    %1860 = vsyncpa [#allocation5], 1

</llo_original>
